<compile_context>
chip_gen: v6e
topology: v6e:2x2x1
jax: 0.10.0
libtpu: 0.0.40
codegen_flags: <defaults>
</compile_context>

<pallas_src>
import functools

import jax
import jax.numpy as jnp
import numpy as np
from jax.experimental import pallas as pl
from jax.experimental.pallas import tpu as pltpu

# ------------------------- configuration -------------------------
NUM_CLASS = 3
INPUT_CHANNELS = 32
REG_FC = [32]
CLS_FC = [32]
SPLIT_INDICES = [7, 7, 1]                   # [mu, sig, pi] channel split (mult=1)
OUTPUT_CH = sum(SPLIT_INDICES)              # 15
SLAB_W = OUTPUT_CH + NUM_CLASS              # 18 = reg(15) + cls(3) fused per-point slab
HID_F = REG_FC[0] + CLS_FC[0]               # 64 fused hidden width per point
INFER_PI_THRESH = 0.1
EPSILON = 1e-12                             # lib_util.epsilon
BN_EPS = 1e-5
MAX_TILE_ROWS = 1024                        # packed rows per grid step (8192 pts @ PACK=8)


def _round_up(x, m):
    return (x + m - 1) // m * m


def _points_per_row():
    """8-point pack (K=256) matches the 256x256 MXU on v6e/v7x; v5e's MXU is
    128 wide so a 4-point pack (K=128) is the right factor there."""
    try:
        kind = jax.devices()[0].device_kind.lower()
        if "v5 lite" in kind or "v5e" in kind or "v5litepod" in kind:
            return 4
    except Exception:
        pass
    return 8


PACK = _points_per_row()


# ------------------------- kernel ---------------------------------
def _head_kernel(x_ref, xyz_ref, w1_ref, t1_ref, w2_ref, b2_ref, sct_ref,
                 msk_ref, out_ref):
    """Fused box+cls head MLP for PACK points per row.

    x_ref   : (T, 32*P) bf16  packed point features
    xyz_ref : (T, 3*P)  f32   packed point xyz (for mu residual add)
    w1_ref  : (32*P, 64*P) bf16  block-diag fused first layers (BN folded)
    t1_ref  : (1, 64*P)  f32  folded BN shift
    w2_ref  : (64*P, 18*P) f32 block-diag fused second layers
    b2_ref  : (1, 18*P)  f32  second-layer bias
    sct_ref : (3*P, 18*P) f32 0/1 scatter matrix: xyz_j -> mu column j
    msk_ref : (1, 18*P)  f32  1.0 on sig columns (per-point cols 7..13)
    out_ref : (T, 18*P)  f32  [mu(7)|sig(7)|pi_raw(1)|cls(3)] x P, lane-dense
    """
    h = jnp.maximum(
        jnp.dot(x_ref[...], w1_ref[...], preferred_element_type=jnp.float32)
        + t1_ref[...], 0.0)                                           # (T, 64P)
    raw = jnp.dot(h, w2_ref[...], preferred_element_type=jnp.float32) + b2_ref[...]
    # fused xyz residual add into the mu x/y/z columns (tiny K=3P matmul)
    raw = raw + jnp.dot(xyz_ref[...], sct_ref[...], preferred_element_type=jnp.float32)
    # stable softplus everywhere, then select sig columns (mask is precomputed)
    sig = jnp.maximum(jax.nn.softplus(raw), EPSILON)
    m = jnp.broadcast_to(msk_ref[...], raw.shape) > 0.5
    out_ref[...] = jnp.where(m, sig, raw)


# ------------------------- param prep ------------------------------
def _fold_bn(gamma, beta, mean, var):
    scale = gamma / jnp.sqrt(var + BN_EPS)
    shift = beta - mean * scale
    return scale.reshape(1, -1), shift.reshape(1, -1)


def _prepare_fused_params(params, pack):
    """Fold BN into W1, fuse box+cls heads, then block-diag pack `pack` points."""
    s1b, t1b = _fold_bn(*params['box_bn1'])
    s1c, t1c = _fold_bn(*params['cls_bn1'])
    hb, hc = REG_FC[0], CLS_FC[0]
    w1 = jnp.concatenate([params['box_w1'] * s1b, params['cls_w1'] * s1c], axis=1)  # (32,64)
    t1 = jnp.concatenate([t1b, t1c], axis=1)                                        # (1,64)
    w2 = jnp.zeros((hb + hc, SLAB_W), jnp.float32)
    w2 = w2.at[:hb, :OUTPUT_CH].set(params['box_w2'])
    w2 = w2.at[hb:, OUTPUT_CH:].set(params['cls_w2'])
    b2 = jnp.zeros((1, SLAB_W), jnp.float32)
    b2 = b2.at[:, :OUTPUT_CH].set(params['box_b2'])
    b2 = b2.at[:, OUTPUT_CH:].set(params['cls_b2'])
    # xyz -> mu[:, :3] scatter, and sig-column mask
    sct = jnp.zeros((3, SLAB_W), jnp.float32).at[jnp.arange(3), jnp.arange(3)].set(1.0)
    msk = jnp.zeros((1, SLAB_W), jnp.float32).at[:, 7:14].set(1.0)
    # block-diagonal packing of `pack` points per row
    eye = jnp.eye(pack, dtype=jnp.float32)
    w1p = jnp.kron(eye, w1).astype(jnp.bfloat16)   # (32P, 64P) bf16
    w2p = jnp.kron(eye, w2)                        # (64P, 18P)
    sctp = jnp.kron(eye, sct)                      # (3P, 18P)
    t1p = jnp.tile(t1, (1, pack))                  # (1, 64P)
    b2p = jnp.tile(b2, (1, pack))                  # (1, 18P)
    mskp = jnp.tile(msk, (1, pack))                # (1, 18P)
    return w1p, t1p, w2p, b2p, sctp, mskp


# ------------------------- wrapper --------------------------------
@functools.partial(jax.jit, static_argnames=("batch_size",))
def point_mixture_density_head_forward(point_features, point_coords, params, batch_size):
    N = point_features.shape[0]
    P = PACK
    rows = pl.cdiv(N, P)
    if rows <= MAX_TILE_ROWS:
        # >= 2 grid steps so v7x can shard the "parallel" axis across both TCs.
        tile_rows = max(16, _round_up(pl.cdiv(rows, 2), 16))
    else:
        tile_rows = MAX_TILE_ROWS
    rows_pad = _round_up(rows, tile_rows)
    n_pad = rows_pad * P

    x = point_features.astype(jnp.bfloat16)            # halve dominant HBM stream
    xyz = point_coords[:, 1:4].astype(jnp.float32)
    if n_pad != N:
        x = jnp.pad(x, ((0, n_pad - N), (0, 0)))
        xyz = jnp.pad(xyz, ((0, n_pad - N), (0, 0)))
    xp = x.reshape(rows_pad, P * INPUT_CHANNELS)        # free contiguous view
    xyzp = xyz.reshape(rows_pad, P * 3)

    w1p, t1p, w2p, b2p, sctp, mskp = _prepare_fused_params(params, P)

    rep = lambda a: pl.BlockSpec(a.shape, lambda i: (0, 0))        # replicated param
    tile = lambda w: pl.BlockSpec((tile_rows, w), lambda i: (i, 0))  # per-tile rows

    slab = pl.pallas_call(
        _head_kernel,
        out_shape=jax.ShapeDtypeStruct((rows_pad, P * SLAB_W), jnp.float32),
        grid_spec=pltpu.PrefetchScalarGridSpec(
            num_scalar_prefetch=0,
            grid=(rows_pad // tile_rows,),
            in_specs=[
                tile(P * INPUT_CHANNELS), tile(P * 3),
                rep(w1p), rep(t1p), rep(w2p), rep(b2p), rep(sctp), rep(mskp),
            ],
            out_specs=tile(P * SLAB_W),
        ),
        compiler_params=pltpu.CompilerParams(dimension_semantics=("parallel",)),
    )(xp, xyzp, w1p, t1p, w2p, b2p, sctp, mskp)

    # Unpack to per-point layout and drop padded rows BEFORE the global softmax.
    slab = slab.reshape(n_pad, SLAB_W)[:N]

    mu = slab[:, 0:7]                                    # xyz residual already added in-kernel
    sig = slab[:, 7:14]                                  # softplus'd in-kernel
    out_pi = slab[:, 14:15]
    cls_preds = slab[:, OUTPUT_CH:OUTPUT_CH + NUM_CLASS]

    # pi = softmax over ALL points (dim=0, batch elements mixed — matches the
    # PyTorch head exactly); N scalars, done in XLA.
    pi = jax.nn.softmax(out_pi, axis=0)
    norm_pi = (pi / jnp.max(pi, axis=0, keepdims=True))[:, 0]
    fg_mask = norm_pi > INFER_PI_THRESH                  # infer_pi_thresh > 0

    cls_scores = jax.nn.sigmoid(jnp.max(cls_preds, axis=1))

    return {
        'mu': mu,
        'sig': sig,
        'pi': pi,
        'point_cls_scores': cls_scores,
        'batch_box_preds': mu.reshape(batch_size, -1, mu.shape[-1]),
        'batch_cls_preds': cls_preds.reshape(batch_size, -1, NUM_CLASS),
        'pi_fg_mask': fg_mask.reshape(batch_size, -1),
    }
    # TODO(synk): training-only assign_targets / loss paths (points_in_boxes CUDA op,
    # focal loss, MoG NLL) are not part of the inference forward and are not implemented.


# ------------------------- pure-JAX reference ----------------------
def reference_forward(point_features, point_coords, params, batch_size):
    s1b, t1b = _fold_bn(*params['box_bn1'])
    s1c, t1c = _fold_bn(*params['cls_bn1'])
    x = point_features
    xyz = point_coords[:, 1:4]
    h = jnp.maximum((x @ params['box_w1']) * s1b + t1b, 0.0)
    reg = h @ params['box_w2'] + params['box_b2']
    h = jnp.maximum((x @ params['cls_w1']) * s1c + t1c, 0.0)
    cls = h @ params['cls_w2'] + params['cls_b2']
    out_mu, out_sig, out_pi = reg[:, :7], reg[:, 7:14], reg[:, 14:15]
    mu = jnp.concatenate([out_mu[:, :2] + xyz[:, :2],
                          out_mu[:, 2:3] + xyz[:, 2:3],
                          out_mu[:, 3:]], axis=1)
    sig = jnp.maximum(jax.nn.softplus(out_sig), EPSILON)
    pi = jax.nn.softmax(out_pi, axis=0)
    norm_pi = (pi / jnp.max(pi, axis=0, keepdims=True))[:, 0]
    return {
        'mu': mu, 'sig': sig, 'pi': pi,
        'point_cls_scores': jax.nn.sigmoid(jnp.max(cls, axis=1)),
        'batch_box_preds': mu.reshape(batch_size, -1, 7),
        'batch_cls_preds': cls.reshape(batch_size, -1, NUM_CLASS),
        'pi_fg_mask': (norm_pi > INFER_PI_THRESH).reshape(batch_size, -1),
    }


# ------------------------- main ------------------------------------
if __name__ == "__main__":
    key = jax.random.PRNGKey(0)
    keys = jax.random.split(key, 16)

    batch_size = 2
    n_per_batch = 128
    N = batch_size * n_per_batch

    point_features = jax.random.normal(keys[0], (N, INPUT_CHANNELS), jnp.float32)
    xyz = jax.random.normal(keys[1], (N, 3), jnp.float32) * 10.0
    bs_idx = jnp.repeat(jnp.arange(batch_size, dtype=jnp.float32), n_per_batch)[:, None]
    point_coords = jnp.concatenate([bs_idx, xyz], axis=1)             # (N, 4) [bs, x, y, z]

    def lin(k, cin, cout, scale=0.1):
        return scale * jax.random.normal(k, (cin, cout), jnp.float32)

    def bn(k0, k1, k2, k3, c):
        return (1.0 + 0.1 * jax.random.normal(k0, (c,), jnp.float32),            # gamma
                0.1 * jax.random.normal(k1, (c,), jnp.float32),                  # beta
                0.1 * jax.random.normal(k2, (c,), jnp.float32),                  # running_mean
                jnp.abs(1.0 + 0.1 * jax.random.normal(k3, (c,), jnp.float32)))   # running_var

    params = {
        'box_w1': lin(keys[2], INPUT_CHANNELS, REG_FC[0]),
        'box_bn1': bn(keys[3], keys[4], keys[5], keys[6], REG_FC[0]),
        'box_w2': lin(keys[7], REG_FC[0], OUTPUT_CH),
        'box_b2': 0.1 * jax.random.normal(keys[8], (1, OUTPUT_CH), jnp.float32),
        'cls_w1': lin(keys[9], INPUT_CHANNELS, CLS_FC[0]),
        'cls_bn1': bn(keys[10], keys[11], keys[12], keys[13], CLS_FC[0]),
        'cls_w2': lin(keys[14], CLS_FC[0], NUM_CLASS),
        'cls_b2': 0.1 * jax.random.normal(keys[15], (1, NUM_CLASS), jnp.float32),
    }

    out = point_mixture_density_head_forward(point_features, point_coords, params, batch_size)
    out = jax.tree_util.tree_map(jax.block_until_ready, out)

    ref = reference_forward(point_features, point_coords, params, batch_size)
    for name in ['mu', 'sig', 'pi', 'point_cls_scores', 'batch_box_preds', 'batch_cls_preds']:
        np.testing.assert_allclose(np.asarray(out[name]), np.asarray(ref[name]),
                                   rtol=2e-2, atol=2e-2)

    print("KERNEL_OK")
</pallas_src>

<mosaic_0001>
module attributes {stable_mosaic.version = 11 : i64} {
  func.func @_head_kernel(%arg0: i32, %arg1: memref<16x256xbf16, #tpu.memory_space<vmem>>, %arg2: memref<16x24xf32, #tpu.memory_space<vmem>>, %arg3: memref<256x512xbf16, #tpu.memory_space<vmem>>, %arg4: memref<1x512xf32, #tpu.memory_space<vmem>>, %arg5: memref<512x144xf32, #tpu.memory_space<vmem>>, %arg6: memref<1x144xf32, #tpu.memory_space<vmem>>, %arg7: memref<24x144xf32, #tpu.memory_space<vmem>>, %arg8: memref<1x144xf32, #tpu.memory_space<vmem>>, %arg9: memref<16x144xf32, #tpu.memory_space<vmem>>) attributes {dimension_semantics = [#tpu.dimension_semantics<parallel>], iteration_bounds = array<i64: 2>, scalar_prefetch = 0 : i64, scratch_operands = 0 : i64, tpu.core_type = #tpu.core_type<tc>, window_params = [{transform_indices = @transform_0, window_bounds = array<i64: 16, 256>}, {transform_indices = @transform_1, window_bounds = array<i64: 16, 24>}, {pipeline_mode = #tpu.pipeline_mode<synchronous>, transform_indices = @transform_2, window_bounds = array<i64: 256, 512>}, {pipeline_mode = #tpu.pipeline_mode<synchronous>, transform_indices = @transform_3, window_bounds = array<i64: 1, 512>}, {pipeline_mode = #tpu.pipeline_mode<synchronous>, transform_indices = @transform_4, window_bounds = array<i64: 512, 144>}, {pipeline_mode = #tpu.pipeline_mode<synchronous>, transform_indices = @transform_5, window_bounds = array<i64: 1, 144>}, {pipeline_mode = #tpu.pipeline_mode<synchronous>, transform_indices = @transform_6, window_bounds = array<i64: 24, 144>}, {pipeline_mode = #tpu.pipeline_mode<synchronous>, transform_indices = @transform_7, window_bounds = array<i64: 1, 144>}, {transform_indices = @transform_8, window_bounds = array<i64: 16, 144>}]} {
    %c0 = arith.constant 0 : index
    %c0_0 = arith.constant 0 : index
    %0 = vector.load %arg1[%c0, %c0_0] : memref<16x256xbf16, #tpu.memory_space<vmem>>, vector<16x256xbf16>
    %c0_1 = arith.constant 0 : index
    %c0_2 = arith.constant 0 : index
    %1 = vector.load %arg3[%c0_1, %c0_2] : memref<256x512xbf16, #tpu.memory_space<vmem>>, vector<256x512xbf16>
    %cst = arith.constant dense<0.000000e+00> : vector<16x512xf32>
    %2 = tpu.matmul %0, %1, %cst {dimension_numbers = #tpu.dot_dimension_numbers<[1], [0], [0], [1], [0, 0, 1, 1], [], []>} : vector<16x256xbf16>, vector<256x512xbf16>, vector<16x512xf32> -> vector<16x512xf32>
    %c0_3 = arith.constant 0 : index
    %c0_4 = arith.constant 0 : index
    %3 = vector.load %arg4[%c0_3, %c0_4] : memref<1x512xf32, #tpu.memory_space<vmem>>, vector<1x512xf32>
    %4 = vector.broadcast %3 : vector<1x512xf32> to vector<16x512xf32>
    %5 = arith.addf %2, %4 : vector<16x512xf32>
    %cst_5 = arith.constant 0.000000e+00 : f32
    %6 = vector.broadcast %cst_5 : f32 to vector<16x512xf32>
    %7 = arith.maximumf %5, %6 : vector<16x512xf32>
    %c0_6 = arith.constant 0 : index
    %c0_7 = arith.constant 0 : index
    %8 = vector.load %arg5[%c0_6, %c0_7] : memref<512x144xf32, #tpu.memory_space<vmem>>, vector<512x144xf32>
    %cst_8 = arith.constant dense<0.000000e+00> : vector<16x144xf32>
    %9 = tpu.matmul %7, %8, %cst_8 {dimension_numbers = #tpu.dot_dimension_numbers<[1], [0], [0], [1], [0, 0, 1, 1], [], []>} : vector<16x512xf32>, vector<512x144xf32>, vector<16x144xf32> -> vector<16x144xf32>
    %c0_9 = arith.constant 0 : index
    %c0_10 = arith.constant 0 : index
    %10 = vector.load %arg6[%c0_9, %c0_10] : memref<1x144xf32, #tpu.memory_space<vmem>>, vector<1x144xf32>
    %11 = vector.broadcast %10 : vector<1x144xf32> to vector<16x144xf32>
    %12 = arith.addf %9, %11 : vector<16x144xf32>
    %c0_11 = arith.constant 0 : index
    %c0_12 = arith.constant 0 : index
    %13 = vector.load %arg2[%c0_11, %c0_12] : memref<16x24xf32, #tpu.memory_space<vmem>>, vector<16x24xf32>
    %c0_13 = arith.constant 0 : index
    %c0_14 = arith.constant 0 : index
    %14 = vector.load %arg7[%c0_13, %c0_14] : memref<24x144xf32, #tpu.memory_space<vmem>>, vector<24x144xf32>
    %cst_15 = arith.constant dense<0.000000e+00> : vector<16x144xf32>
    %15 = tpu.matmul %13, %14, %cst_15 {dimension_numbers = #tpu.dot_dimension_numbers<[1], [0], [0], [1], [0, 0, 1, 1], [], []>} : vector<16x24xf32>, vector<24x144xf32>, vector<16x144xf32> -> vector<16x144xf32>
    %16 = arith.addf %12, %15 : vector<16x144xf32>
    %cst_16 = arith.constant 0.000000e+00 : f32
    %17 = vector.broadcast %cst_16 : f32 to vector<16x144xf32>
    %18 = arith.maximumf %16, %17 : vector<16x144xf32>
    %19 = vector.broadcast %cst_16 : f32 to vector<16x144xf32>
    %20 = arith.subf %16, %19 : vector<16x144xf32>
    %21 = arith.cmpf one, %20, %20 : vector<16x144xf32>
    %22 = vector.broadcast %cst_16 : f32 to vector<16x144xf32>
    %23 = arith.addf %16, %22 : vector<16x144xf32>
    %24 = math.absf %20 : vector<16x144xf32>
    %cst_17 = arith.constant 0.000000e+00 : f32
    %25 = vector.broadcast %cst_17 : f32 to vector<16x144xf32>
    %26 = arith.subf %25, %24 : vector<16x144xf32>
    %27 = math.exp %26 : vector<16x144xf32>
    %28 = math.log1p %27 : vector<16x144xf32>
    %29 = arith.addf %18, %28 : vector<16x144xf32>
    %30 = arith.select %21, %23, %29 : vector<16x144xi1>, vector<16x144xf32>
    %cst_18 = arith.constant 9.99999996E-13 : f32
    %31 = vector.broadcast %cst_18 : f32 to vector<16x144xf32>
    %32 = arith.maximumf %30, %31 : vector<16x144xf32>
    %c0_19 = arith.constant 0 : index
    %c0_20 = arith.constant 0 : index
    %33 = vector.load %arg8[%c0_19, %c0_20] : memref<1x144xf32, #tpu.memory_space<vmem>>, vector<1x144xf32>
    %34 = vector.shape_cast %33 : vector<1x144xf32> to vector<1x144xf32>
    %35 = vector.broadcast %34 : vector<1x144xf32> to vector<16x144xf32>
    %cst_21 = arith.constant 5.000000e-01 : f32
    %36 = vector.broadcast %cst_21 : f32 to vector<16x144xf32>
    %37 = arith.cmpf ogt, %35, %36 : vector<16x144xf32>
    %38 = arith.select %37, %32, %16 : vector<16x144xi1>, vector<16x144xf32>
    %c0_22 = arith.constant 0 : index
    %c0_23 = arith.constant 0 : index
    %39 = vector.load %arg9[%c0_22, %c0_23] : memref<16x144xf32, #tpu.memory_space<vmem>>, vector<16x144xf32>
    tpu.vector_store %arg9[%c0_22, %c0_23], %38 {strides = array<i32>} : memref<16x144xf32, #tpu.memory_space<vmem>>, vector<16x144xf32>,
    return
  }
  func.func @transform_0(%arg0: i32) -> (i32, i32) {
    %c0_i32 = arith.constant 0 : i32
    %c0_i32_0 = arith.constant 0 : i32
    return %arg0, %c0_i32 : i32, i32
  }
  func.func @transform_1(%arg0: i32) -> (i32, i32) {
    %c0_i32 = arith.constant 0 : i32
    %c0_i32_0 = arith.constant 0 : i32
    return %arg0, %c0_i32 : i32, i32
  }
  func.func @transform_2(%arg0: i32) -> (i32, i32) {
    %c0_i32 = arith.constant 0 : i32
    %c0_i32_0 = arith.constant 0 : i32
    %c0_i32_1 = arith.constant 0 : i32
    return %c0_i32, %c0_i32_0 : i32, i32
  }
  func.func @transform_3(%arg0: i32) -> (i32, i32) {
    %c0_i32 = arith.constant 0 : i32
    %c0_i32_0 = arith.constant 0 : i32
    %c0_i32_1 = arith.constant 0 : i32
    return %c0_i32, %c0_i32_0 : i32, i32
  }
  func.func @transform_4(%arg0: i32) -> (i32, i32) {
    %c0_i32 = arith.constant 0 : i32
    %c0_i32_0 = arith.constant 0 : i32
    %c0_i32_1 = arith.constant 0 : i32
    return %c0_i32, %c0_i32_0 : i32, i32
  }
  func.func @transform_5(%arg0: i32) -> (i32, i32) {
    %c0_i32 = arith.constant 0 : i32
    %c0_i32_0 = arith.constant 0 : i32
    %c0_i32_1 = arith.constant 0 : i32
    return %c0_i32, %c0_i32_0 : i32, i32
  }
  func.func @transform_6(%arg0: i32) -> (i32, i32) {
    %c0_i32 = arith.constant 0 : i32
    %c0_i32_0 = arith.constant 0 : i32
    %c0_i32_1 = arith.constant 0 : i32
    return %c0_i32, %c0_i32_0 : i32, i32
  }
  func.func @transform_7(%arg0: i32) -> (i32, i32) {
    %c0_i32 = arith.constant 0 : i32
    %c0_i32_0 = arith.constant 0 : i32
    %c0_i32_1 = arith.constant 0 : i32
    return %c0_i32, %c0_i32_0 : i32, i32
  }
  func.func @transform_8(%arg0: i32) -> (i32, i32) {
    %c0_i32 = arith.constant 0 : i32
    %c0_i32_0 = arith.constant 0 : i32
    return %arg0, %c0_i32 : i32, i32
  }
}

</mosaic_0001>

<llo_original>
// kernel: point_mixture_density_head_forward.1
$region0: #{point_mixture_density_head_forward.1}
  #allocation0 [shape = 'u32[]', space=smem, size = 0x4, offset = 0x4, fixed_abs, tag = 'smem constant byte address 0x4 - core index']
  #allocation1 [shape = 'u32[144,128]{1,0:T(1,128)}', space=vmem, size = 0x12000, scoped, tag = 'internal scratch']
  %s0 = inlined_call_operand.vmem [shape: bf16[32,256], index: 0, kind: input, shape index: {}]
  %s1 = inlined_call_operand.vmem [shape: f32[32,24], index: 1, kind: input, shape index: {}]
  %s2 = inlined_call_operand.vmem [shape: bf16[256,512], index: 2, kind: input, shape index: {}]
  %s3 = inlined_call_operand.vmem [shape: f32[1,512], index: 3, kind: input, shape index: {}]
  %s4 = inlined_call_operand.vmem [shape: f32[512,144], index: 4, kind: input, shape index: {}]
  %s5 = inlined_call_operand.vmem [shape: f32[1,144], index: 5, kind: input, shape index: {}]
  %s6 = inlined_call_operand.vmem [shape: f32[24,144], index: 6, kind: input, shape index: {}]
  %s7 = inlined_call_operand.vmem [shape: f32[1,144], index: 7, kind: input, shape index: {}]
  %s8 = inlined_call_operand.vmem [shape: f32[32,144], index: 8, kind: output, shape index: {}]
  %s9 = sld [smem:[#allocation0]]
  $region65: #{point_mixture_density_head_forward.1} parent=0
    _
  %s11 = ssub.s32 1, %s9
  %s12 = scalar_select 0, %s11, %s9
  loop: start=0, step=1, limit=4
  $region2: #{point_mixture_density_head_forward.1} parent=0 // loop_pre_header
    _
  $region3: #{point_mixture_density_head_forward.1} parent=0 // loop_header
    %s14 = sphi 0, %s18
    %p15 = scmp.ge.s32.totalorder %s14, 4
    %s24 = sphi 0, %s26
    %s27 = sphi 0, %s24
    %s28 = sphi 0, %s27
    %s44 = sphi 0, %s28
    %s50 = sphi 0, %s52
    %s53 = sphi 0, %s50
    %s54 = sphi 0, %s53
    %s70 = sphi 0, %s54
    %s74 = sphi 0, %s74
    %s76 = sphi 0, %s74
    %s77 = sphi 0, %s76
    %s91 = sphi 0, %s77
    %s95 = sphi 0, %s95
    %s97 = sphi 0, %s95
    %s98 = sphi 0, %s97
    %s112 = sphi 0, %s98
    %s116 = sphi 0, %s116
    %s118 = sphi 0, %s116
    %s119 = sphi 0, %s118
    %s133 = sphi 0, %s119
    %s137 = sphi 0, %s137
    %s139 = sphi 0, %s137
    %s140 = sphi 0, %s139
    %s154 = sphi 0, %s140
    %s158 = sphi 0, %s158
    %s160 = sphi 0, %s158
    %s161 = sphi 0, %s160
    %s175 = sphi 0, %s161
    %s179 = sphi 0, %s179
    %s181 = sphi 0, %s179
    %s182 = sphi 0, %s181
    %s196 = sphi 0, %s182
    %s202 = sphi 0, %s204
    %s205 = sphi 0, %s202
    %s206 = sphi 0, %s205
    %s222 = sphi 0, %s206
  $region4: #{point_mixture_density_head_forward.1} parent=0 // loop_header_branch
    %17 = sbr.rel (%p15) target = $region8
  $region5: #{point_mixture_density_head_forward.1} parent=0 // loop_body
    %s19 = ssub.s32 %s14, 1
    %s20 = ssub.s32 %s14, 2
    %s21 = sadd.s32 %s14, 1
    %s22 = ssub.s32 %s14, %s21
    %p23 = scmp.eq.s32.totalorder %s22, 0
    %s25 = sadd.s32 %s24, 1
    %s26 = scalar_select %p23, %s24, %s25
    %p29 = pneg %p23
    %p30 = scmp.eq.s32.totalorder %s14, 1
    %p31 = por %p29, %p30
    %p32 = scmp.ne.s32.totalorder %s24, %s27
    %p33 = scmp.eq.s32.totalorder %s14, 0
    %p34 = por %p32, %p33
    %p35 = scmp.ne.s32.totalorder %s24, %s27
    %p36 = scmp.eq.s32.totalorder %s19, 1
    %p37 = por %p35, %p36
    %p38 = scmp.ne.s32.totalorder %s27, %s28
    %p39 = scmp.eq.s32.totalorder %s19, 0
    %p40 = por %p38, %p39
    %p41 = scmp.ne.s32.totalorder %s27, %s28
    %p42 = scmp.eq.s32.totalorder %s20, 1
    %p43 = por %p41, %p42
    %p45 = scmp.ne.s32.totalorder %s28, %s44
    %p46 = scmp.eq.s32.totalorder %s20, 0
    %p47 = por %p45, %p46
    %s48 = ssub.s32 %s14, %s21
    %p49 = scmp.eq.s32.totalorder %s48, 0
    %s51 = sadd.s32 %s50, 1
    %s52 = scalar_select %p49, %s50, %s51
    %p55 = pneg %p49
    %p56 = scmp.eq.s32.totalorder %s14, 1
    %p57 = por %p55, %p56
    %p58 = scmp.ne.s32.totalorder %s50, %s53
    %p59 = scmp.eq.s32.totalorder %s14, 0
    %p60 = por %p58, %p59
    %p61 = scmp.ne.s32.totalorder %s50, %s53
    %p62 = scmp.eq.s32.totalorder %s19, 1
    %p63 = por %p61, %p62
    %p64 = scmp.ne.s32.totalorder %s53, %s54
    %p65 = scmp.eq.s32.totalorder %s19, 0
    %p66 = por %p64, %p65
    %p67 = scmp.ne.s32.totalorder %s53, %s54
    %p68 = scmp.eq.s32.totalorder %s20, 1
    %p69 = por %p67, %p68
    %p71 = scmp.ne.s32.totalorder %s54, %s70
    %p72 = scmp.eq.s32.totalorder %s20, 0
    %p73 = por %p71, %p72
    %s75 = sadd.s32 %s74, 1
    %p78 = scmp.eq.s32.totalorder %s14, 1
    %p79 = scmp.ne.s32.totalorder %s74, %s76
    %p80 = scmp.eq.s32.totalorder %s14, 0
    %p81 = por %p79, %p80
    %p82 = scmp.ne.s32.totalorder %s74, %s76
    %p83 = scmp.eq.s32.totalorder %s19, 1
    %p84 = por %p82, %p83
    %p85 = scmp.ne.s32.totalorder %s76, %s77
    %p86 = scmp.eq.s32.totalorder %s19, 0
    %p87 = por %p85, %p86
    %p88 = scmp.ne.s32.totalorder %s76, %s77
    %p89 = scmp.eq.s32.totalorder %s20, 1
    %p90 = por %p88, %p89
    %p92 = scmp.ne.s32.totalorder %s77, %s91
    %p93 = scmp.eq.s32.totalorder %s20, 0
    %p94 = por %p92, %p93
    %s96 = sadd.s32 %s95, 1
    %p99 = scmp.eq.s32.totalorder %s14, 1
    %p100 = scmp.ne.s32.totalorder %s95, %s97
    %p101 = scmp.eq.s32.totalorder %s14, 0
    %p102 = por %p100, %p101
    %p103 = scmp.ne.s32.totalorder %s95, %s97
    %p104 = scmp.eq.s32.totalorder %s19, 1
    %p105 = por %p103, %p104
    %p106 = scmp.ne.s32.totalorder %s97, %s98
    %p107 = scmp.eq.s32.totalorder %s19, 0
    %p108 = por %p106, %p107
    %p109 = scmp.ne.s32.totalorder %s97, %s98
    %p110 = scmp.eq.s32.totalorder %s20, 1
    %p111 = por %p109, %p110
    %p113 = scmp.ne.s32.totalorder %s98, %s112
    %p114 = scmp.eq.s32.totalorder %s20, 0
    %p115 = por %p113, %p114
    %s117 = sadd.s32 %s116, 1
    %p120 = scmp.eq.s32.totalorder %s14, 1
    %p121 = scmp.ne.s32.totalorder %s116, %s118
    %p122 = scmp.eq.s32.totalorder %s14, 0
    %p123 = por %p121, %p122
    %p124 = scmp.ne.s32.totalorder %s116, %s118
    %p125 = scmp.eq.s32.totalorder %s19, 1
    %p126 = por %p124, %p125
    %p127 = scmp.ne.s32.totalorder %s118, %s119
    %p128 = scmp.eq.s32.totalorder %s19, 0
    %p129 = por %p127, %p128
    %p130 = scmp.ne.s32.totalorder %s118, %s119
    %p131 = scmp.eq.s32.totalorder %s20, 1
    %p132 = por %p130, %p131
    %p134 = scmp.ne.s32.totalorder %s119, %s133
    %p135 = scmp.eq.s32.totalorder %s20, 0
    %p136 = por %p134, %p135
    %s138 = sadd.s32 %s137, 1
    %p141 = scmp.eq.s32.totalorder %s14, 1
    %p142 = scmp.ne.s32.totalorder %s137, %s139
    %p143 = scmp.eq.s32.totalorder %s14, 0
    %p144 = por %p142, %p143
    %p145 = scmp.ne.s32.totalorder %s137, %s139
    %p146 = scmp.eq.s32.totalorder %s19, 1
    %p147 = por %p145, %p146
    %p148 = scmp.ne.s32.totalorder %s139, %s140
    %p149 = scmp.eq.s32.totalorder %s19, 0
    %p150 = por %p148, %p149
    %p151 = scmp.ne.s32.totalorder %s139, %s140
    %p152 = scmp.eq.s32.totalorder %s20, 1
    %p153 = por %p151, %p152
    %p155 = scmp.ne.s32.totalorder %s140, %s154
    %p156 = scmp.eq.s32.totalorder %s20, 0
    %p157 = por %p155, %p156
    %s159 = sadd.s32 %s158, 1
    %p162 = scmp.eq.s32.totalorder %s14, 1
    %p163 = scmp.ne.s32.totalorder %s158, %s160
    %p164 = scmp.eq.s32.totalorder %s14, 0
    %p165 = por %p163, %p164
    %p166 = scmp.ne.s32.totalorder %s158, %s160
    %p167 = scmp.eq.s32.totalorder %s19, 1
    %p168 = por %p166, %p167
    %p169 = scmp.ne.s32.totalorder %s160, %s161
    %p170 = scmp.eq.s32.totalorder %s19, 0
    %p171 = por %p169, %p170
    %p172 = scmp.ne.s32.totalorder %s160, %s161
    %p173 = scmp.eq.s32.totalorder %s20, 1
    %p174 = por %p172, %p173
    %p176 = scmp.ne.s32.totalorder %s161, %s175
    %p177 = scmp.eq.s32.totalorder %s20, 0
    %p178 = por %p176, %p177
    %s180 = sadd.s32 %s179, 1
    %p183 = scmp.eq.s32.totalorder %s14, 1
    %p184 = scmp.ne.s32.totalorder %s179, %s181
    %p185 = scmp.eq.s32.totalorder %s14, 0
    %p186 = por %p184, %p185
    %p187 = scmp.ne.s32.totalorder %s179, %s181
    %p188 = scmp.eq.s32.totalorder %s19, 1
    %p189 = por %p187, %p188
    %p190 = scmp.ne.s32.totalorder %s181, %s182
    %p191 = scmp.eq.s32.totalorder %s19, 0
    %p192 = por %p190, %p191
    %p193 = scmp.ne.s32.totalorder %s181, %s182
    %p194 = scmp.eq.s32.totalorder %s20, 1
    %p195 = por %p193, %p194
    %p197 = scmp.ne.s32.totalorder %s182, %s196
    %p198 = scmp.eq.s32.totalorder %s20, 0
    %p199 = por %p197, %p198
    %s200 = ssub.s32 %s14, %s21
    %p201 = scmp.eq.s32.totalorder %s200, 0
    %s203 = sadd.s32 %s202, 1
    %s204 = scalar_select %p201, %s202, %s203
    %p207 = pneg %p201
    %p208 = scmp.eq.s32.totalorder %s14, 1
    %p209 = por %p207, %p208
    %p210 = scmp.ne.s32.totalorder %s202, %s205
    %p211 = scmp.eq.s32.totalorder %s14, 0
    %p212 = por %p210, %p211
    %p213 = scmp.ne.s32.totalorder %s202, %s205
    %p214 = scmp.eq.s32.totalorder %s19, 1
    %p215 = por %p213, %p214
    %p216 = scmp.ne.s32.totalorder %s205, %s206
    %p217 = scmp.eq.s32.totalorder %s19, 0
    %p218 = por %p216, %p217
    %p219 = scmp.ne.s32.totalorder %s205, %s206
    %p220 = scmp.eq.s32.totalorder %s20, 1
    %p221 = por %p219, %p220
    %p223 = scmp.ne.s32.totalorder %s206, %s222
    %p224 = scmp.eq.s32.totalorder %s20, 0
    %p225 = por %p223, %p224
    %p226 = scmp.le.s32.totalorder 1, %s14
    %p227 = scmp.lt.s32.totalorder %s14, 3
    %p228 = pnand %p226, %p227
    %p229 = pneg %p228
    // Predicated region
    $region9: #{point_mixture_density_head_forward.1} parent=5 // pred_check
      _
    $region10: #{point_mixture_density_head_forward.1} parent=5 // pred_check_branch
      %231 = sbr.rel (%p228) target = $region12
    $region11: #{point_mixture_density_head_forward.1} parent=5 // pred_region
      %s232 = ssub.s32 %s14, 1
      // Predicated region
      $region13: #{point_mixture_density_head_forward.1} parent=11 // pred_check
        %p233 = pneg %p87
      $region14: #{point_mixture_density_head_forward.1} parent=11 // pred_check_branch
        %235 = sbr.rel (%p233) target = $region16
      $region15: #{point_mixture_density_head_forward.1} parent=11 // pred_region
        _
      $region16: #{point_mixture_density_head_forward.1} parent=11 // pred_fallthru
        _
      // Predicated region
      $region17: #{point_mixture_density_head_forward.1} parent=11 // pred_check
        %p236 = pneg %p108
      $region18: #{point_mixture_density_head_forward.1} parent=11 // pred_check_branch
        %238 = sbr.rel (%p236) target = $region20
      $region19: #{point_mixture_density_head_forward.1} parent=11 // pred_region
        _
      $region20: #{point_mixture_density_head_forward.1} parent=11 // pred_fallthru
        _
      // Predicated region
      $region21: #{point_mixture_density_head_forward.1} parent=11 // pred_check
        %p239 = pneg %p129
      $region22: #{point_mixture_density_head_forward.1} parent=11 // pred_check_branch
        %241 = sbr.rel (%p239) target = $region24
      $region23: #{point_mixture_density_head_forward.1} parent=11 // pred_region
        _
      $region24: #{point_mixture_density_head_forward.1} parent=11 // pred_fallthru
        _
      // Predicated region
      $region25: #{point_mixture_density_head_forward.1} parent=11 // pred_check
        %p242 = pneg %p150
      $region26: #{point_mixture_density_head_forward.1} parent=11 // pred_check_branch
        %244 = sbr.rel (%p242) target = $region28
      $region27: #{point_mixture_density_head_forward.1} parent=11 // pred_region
        _
      $region28: #{point_mixture_density_head_forward.1} parent=11 // pred_fallthru
        _
      // Predicated region
      $region29: #{point_mixture_density_head_forward.1} parent=11 // pred_check
        %p245 = pneg %p171
      $region30: #{point_mixture_density_head_forward.1} parent=11 // pred_check_branch
        %247 = sbr.rel (%p245) target = $region32
      $region31: #{point_mixture_density_head_forward.1} parent=11 // pred_region
        _
      $region32: #{point_mixture_density_head_forward.1} parent=11 // pred_fallthru
        _
      // Predicated region
      $region33: #{point_mixture_density_head_forward.1} parent=11 // pred_check
        %p248 = pneg %p192
      $region34: #{point_mixture_density_head_forward.1} parent=11 // pred_check_branch
        %250 = sbr.rel (%p248) target = $region36
      $region35: #{point_mixture_density_head_forward.1} parent=11 // pred_region
        _
      $region36: #{point_mixture_density_head_forward.1} parent=11 // pred_fallthru
        _
    $region12: #{point_mixture_density_head_forward.1} parent=5 // pred_fallthru
      _
    %p251 = scmp.lt.s32.totalorder %s14, 2
    // Predicated region
    $region37: #{point_mixture_density_head_forward.1} parent=5 // pred_check
      %p252 = pneg %p251
    $region38: #{point_mixture_density_head_forward.1} parent=5 // pred_check_branch
      %254 = sbr.rel (%p252) target = $region40
    $region39: #{point_mixture_density_head_forward.1} parent=5 // pred_region
      // Predicated region
      $region41: #{point_mixture_density_head_forward.1} parent=39 // pred_check
        %p255 = pneg %p34
      $region42: #{point_mixture_density_head_forward.1} parent=39 // pred_check_branch
        %257 = sbr.rel (%p255) target = $region44
      $region43: #{point_mixture_density_head_forward.1} parent=39 // pred_region
        %s258 = smul.u32 2, %s14
        %p259 = scmp.lt.s32.totalorder %s258, 3
        %s260 = scalar_select %p259, %s258, 3
        %s261 = smul.addr %s260, 2
        %s262 = smul.addr %s261, 4
        %s263 = scalar_lea.vmem %s0, %s262
        %s264 = smul.u32 2, %s14
      $region44: #{point_mixture_density_head_forward.1} parent=39 // pred_fallthru
        _
      // Predicated region
      $region45: #{point_mixture_density_head_forward.1} parent=39 // pred_check
        %p265 = pneg %p60
      $region46: #{point_mixture_density_head_forward.1} parent=39 // pred_check_branch
        %267 = sbr.rel (%p265) target = $region48
      $region47: #{point_mixture_density_head_forward.1} parent=39 // pred_region
        %s268 = smul.u32 2, %s14
        %p269 = scmp.lt.s32.totalorder %s268, 3
        %s270 = scalar_select %p269, %s268, 3
        %s271 = smul.addr %s270, 8
        %s272 = scalar_lea.vmem %s1, %s271
        %s273 = smul.u32 2, %s14
      $region48: #{point_mixture_density_head_forward.1} parent=39 // pred_fallthru
        _
    $region40: #{point_mixture_density_head_forward.1} parent=5 // pred_fallthru
      _
    %p274 = scmp.le.s32.totalorder 1, %s14
    %p275 = scmp.lt.s32.totalorder %s14, 3
    %p276 = pnand %p274, %p275
    %p277 = pneg %p276
    // Predicated region
    $region49: #{point_mixture_density_head_forward.1} parent=5 // pred_check
      _
    $region50: #{point_mixture_density_head_forward.1} parent=5 // pred_check_branch
      %279 = sbr.rel (%p276) target = $region52
    $region51: #{point_mixture_density_head_forward.1} parent=5 // pred_region
      %s280 = ssub.s32 %s14, 1
      %s281 = smul.u32 2, %s19
      %p282 = scmp.lt.s32.totalorder %s281, 3
      %s283 = scalar_select %p282, %s281, 3
      %s284 = smul.addr %s283, 2
      %s285 = smul.addr %s284, 4
      %s286 = scalar_lea.vmem %s0, %s285
      %p287 = pneg %p40
      %p288 = pneg %p37
      %s289 = smul.u32 2, %s19
      %p290 = scmp.lt.s32.totalorder %s289, 3
      %s291 = scalar_select %p290, %s289, 3
      %s292 = smul.addr %s291, 8
      %s293 = scalar_lea.vmem %s1, %s292
      %p294 = pneg %p66
      %p295 = pneg %p63
      %p296 = pneg %p87
      %p297 = pneg %p84
      %p298 = pneg %p108
      %p299 = pneg %p105
      %p300 = pneg %p129
      %p301 = pneg %p126
      %p302 = pneg %p150
      %p303 = pneg %p147
      %p304 = pneg %p171
      %p305 = pneg %p168
      %p306 = pneg %p192
      %p307 = pneg %p189
      %p308 = pneg %p218
      %p309 = pneg %p215
      %s310 = smul.u32 2, %s19
      %p311 = scmp.lt.s32.totalorder %s310, 3
      %s312 = scalar_select %p311, %s310, 3
      %s313 = smul.addr %s312, 2
      %s314 = smul.addr %s313, 8
      %s315 = scalar_lea.vmem %s8, %s314
      %s316 = smul.u32 2, %s19
      %p317 = scmp.lt.s32.totalorder %s316, 3
      %s318 = scalar_select %p317, %s316, 3
      %s319 = smul.addr %s318, 2
      %s320 = smul.addr %s319, 4
      %s321 = scalar_lea.vmem %s0, %s320
      %s322 = smul.u32 2, %s19
      %s323 = smul.u32 2, %s19
      %p324 = scmp.lt.s32.totalorder %s323, 3
      %s325 = scalar_select %p324, %s323, 3
      %s326 = smul.addr %s325, 8
      %s327 = scalar_lea.vmem %s1, %s326
      %s328 = smul.u32 2, %s19
      %s329 = smul.u32 2, %s19
      %p330 = scmp.lt.s32.totalorder %s329, 3
      %s331 = scalar_select %p330, %s329, 3
      %s332 = smul.addr %s331, 2
      %s333 = smul.addr %s332, 8
      %s334 = scalar_lea.vmem %s8, %s333
      %s335 = smul.u32 2, %s19
      %v336 = vld [vmem:[%s321] sm:$0xff]
      %v337 = vld [vmem:[%s321 + $0x8] sm:$0xff]
      %v338 = vld [vmem:[%s2] sm:$0xff]
      %v339 = vld [vmem:[%s2 + $0x8] sm:$0xff]
      %v340 = vld [vmem:[%s2 + $0x10] sm:$0xff]
      %v341 = vld [vmem:[%s2 + $0x18] sm:$0xff]
      %v342 = vld [vmem:[%s2 + $0x20] sm:$0xff]
      %v343 = vld [vmem:[%s2 + $0x28] sm:$0xff]
      %v344 = vld [vmem:[%s2 + $0x30] sm:$0xff]
      %v345 = vld [vmem:[%s2 + $0x38] sm:$0xff]
      %v346 = vld [vmem:[%s2 + $0x40] sm:$0xff]
      %v347 = vld [vmem:[%s2 + $0x48] sm:$0xff]
      %v348 = vld [vmem:[%s2 + $0x50] sm:$0xff]
      %v349 = vld [vmem:[%s2 + $0x58] sm:$0xff]
      %v350 = vld [vmem:[%s2 + $0x60] sm:$0xff]
      %v351 = vld [vmem:[%s2 + $0x68] sm:$0xff]
      %v352 = vld [vmem:[%s2 + $0x70] sm:$0xff]
      %v353 = vld [vmem:[%s2 + $0x78] sm:$0xff]
      %v354 = vld [vmem:[%s2 + $0x80] sm:$0xff]
      %v355 = vld [vmem:[%s2 + $0x88] sm:$0xff]
      %v356 = vld [vmem:[%s2 + $0x90] sm:$0xff]
      %v357 = vld [vmem:[%s2 + $0x98] sm:$0xff]
      %v358 = vld [vmem:[%s2 + $0xa0] sm:$0xff]
      %v359 = vld [vmem:[%s2 + $0xa8] sm:$0xff]
      %v360 = vld [vmem:[%s2 + $0xb0] sm:$0xff]
      %v361 = vld [vmem:[%s2 + $0xb8] sm:$0xff]
      %v362 = vld [vmem:[%s2 + $0xc0] sm:$0xff]
      %v363 = vld [vmem:[%s2 + $0xc8] sm:$0xff]
      %v364 = vld [vmem:[%s2 + $0xd0] sm:$0xff]
      %v365 = vld [vmem:[%s2 + $0xd8] sm:$0xff]
      %v366 = vld [vmem:[%s2 + $0xe0] sm:$0xff]
      %v367 = vld [vmem:[%s2 + $0xe8] sm:$0xff]
      %v368 = vld [vmem:[%s2 + $0xf0] sm:$0xff]
      %v369 = vld [vmem:[%s2 + $0xf8] sm:$0xff]
      %v370 = vld [vmem:[%s2 + $0x100] sm:$0xff]
      %v371 = vld [vmem:[%s2 + $0x108] sm:$0xff]
      %v372 = vld [vmem:[%s2 + $0x110] sm:$0xff]
      %v373 = vld [vmem:[%s2 + $0x118] sm:$0xff]
      %v374 = vld [vmem:[%s2 + $0x120] sm:$0xff]
      %v375 = vld [vmem:[%s2 + $0x128] sm:$0xff]
      %v376 = vld [vmem:[%s2 + $0x130] sm:$0xff]
      %v377 = vld [vmem:[%s2 + $0x138] sm:$0xff]
      %v378 = vld [vmem:[%s2 + $0x140] sm:$0xff]
      %v379 = vld [vmem:[%s2 + $0x148] sm:$0xff]
      %v380 = vld [vmem:[%s2 + $0x150] sm:$0xff]
      %v381 = vld [vmem:[%s2 + $0x158] sm:$0xff]
      %v382 = vld [vmem:[%s2 + $0x160] sm:$0xff]
      %v383 = vld [vmem:[%s2 + $0x168] sm:$0xff]
      %v384 = vld [vmem:[%s2 + $0x170] sm:$0xff]
      %v385 = vld [vmem:[%s2 + $0x178] sm:$0xff]
      %v386 = vld [vmem:[%s2 + $0x180] sm:$0xff]
      %v387 = vld [vmem:[%s2 + $0x188] sm:$0xff]
      %v388 = vld [vmem:[%s2 + $0x190] sm:$0xff]
      %v389 = vld [vmem:[%s2 + $0x198] sm:$0xff]
      %v390 = vld [vmem:[%s2 + $0x1a0] sm:$0xff]
      %v391 = vld [vmem:[%s2 + $0x1a8] sm:$0xff]
      %v392 = vld [vmem:[%s2 + $0x1b0] sm:$0xff]
      %v393 = vld [vmem:[%s2 + $0x1b8] sm:$0xff]
      %v394 = vld [vmem:[%s2 + $0x1c0] sm:$0xff]
      %v395 = vld [vmem:[%s2 + $0x1c8] sm:$0xff]
      %v396 = vld [vmem:[%s2 + $0x1d0] sm:$0xff]
      %v397 = vld [vmem:[%s2 + $0x1d8] sm:$0xff]
      %v398 = vld [vmem:[%s2 + $0x1e0] sm:$0xff]
      %v399 = vld [vmem:[%s2 + $0x1e8] sm:$0xff]
      %v400 = vld [vmem:[%s2 + $0x1f0] sm:$0xff]
      %v401 = vld [vmem:[%s2 + $0x1f8] sm:$0xff]
      %v402 = vld [vmem:[%s3] sm:$0xf]
      %v404 = vlaneseq
      %v405 = vshrl.u32 %v404, 7
      %v406 = vsub.s32 0, %v405
      %v407 = vrot.slane %v402, %v406
      %v408 = vlaneseq
      %v409 = vshrl.u32 %v408, 7
      %v410 = vsub.s32 1, %v409
      %v411 = vrot.slane %v402, %v410
      %v412 = vlaneseq
      %v413 = vshrl.u32 %v412, 7
      %v414 = vsub.s32 2, %v413
      %v415 = vrot.slane %v402, %v414
      %v416 = vlaneseq
      %v417 = vshrl.u32 %v416, 7
      %v418 = vsub.s32 3, %v417
      %v419 = vrot.slane %v402, %v418
      %v426 = vunpack.c.l.b16 %v336
      %v427 = vunpack.c.h.b16 %v336
      %v428 = vunpack.c.l.b16 %v337
      %v429 = vunpack.c.h.b16 %v337
      %v430 = vpack.c.b16 %v428, %v426
      %v431 = vpack.c.b16 %v429, %v427
      %v498 = vunpack.c.l.b16 %v338
      %v499 = vunpack.c.h.b16 %v338
      %v500 = vunpack.c.l.b16 %v339
      %v501 = vunpack.c.h.b16 %v339
      %v502 = vunpack.c.l.b16 %v340
      %v503 = vunpack.c.h.b16 %v340
      %v504 = vunpack.c.l.b16 %v341
      %v505 = vunpack.c.h.b16 %v341
      %v506 = vunpack.c.l.b16 %v342
      %v507 = vunpack.c.h.b16 %v342
      %v508 = vunpack.c.l.b16 %v343
      %v509 = vunpack.c.h.b16 %v343
      %v510 = vunpack.c.l.b16 %v344
      %v511 = vunpack.c.h.b16 %v344
      %v512 = vunpack.c.l.b16 %v345
      %v513 = vunpack.c.h.b16 %v345
      %v514 = vunpack.c.l.b16 %v346
      %v515 = vunpack.c.h.b16 %v346
      %v516 = vunpack.c.l.b16 %v347
      %v517 = vunpack.c.h.b16 %v347
      %v518 = vunpack.c.l.b16 %v348
      %v519 = vunpack.c.h.b16 %v348
      %v520 = vunpack.c.l.b16 %v349
      %v521 = vunpack.c.h.b16 %v349
      %v522 = vunpack.c.l.b16 %v350
      %v523 = vunpack.c.h.b16 %v350
      %v524 = vunpack.c.l.b16 %v351
      %v525 = vunpack.c.h.b16 %v351
      %v526 = vunpack.c.l.b16 %v352
      %v527 = vunpack.c.h.b16 %v352
      %v528 = vunpack.c.l.b16 %v353
      %v529 = vunpack.c.h.b16 %v353
      %v530 = vunpack.c.l.b16 %v354
      %v531 = vunpack.c.h.b16 %v354
      %v532 = vunpack.c.l.b16 %v355
      %v533 = vunpack.c.h.b16 %v355
      %v534 = vunpack.c.l.b16 %v356
      %v535 = vunpack.c.h.b16 %v356
      %v536 = vunpack.c.l.b16 %v357
      %v537 = vunpack.c.h.b16 %v357
      %v538 = vunpack.c.l.b16 %v358
      %v539 = vunpack.c.h.b16 %v358
      %v540 = vunpack.c.l.b16 %v359
      %v541 = vunpack.c.h.b16 %v359
      %v542 = vunpack.c.l.b16 %v360
      %v543 = vunpack.c.h.b16 %v360
      %v544 = vunpack.c.l.b16 %v361
      %v545 = vunpack.c.h.b16 %v361
      %v546 = vunpack.c.l.b16 %v362
      %v547 = vunpack.c.h.b16 %v362
      %v548 = vunpack.c.l.b16 %v363
      %v549 = vunpack.c.h.b16 %v363
      %v550 = vunpack.c.l.b16 %v364
      %v551 = vunpack.c.h.b16 %v364
      %v552 = vunpack.c.l.b16 %v365
      %v553 = vunpack.c.h.b16 %v365
      %v554 = vunpack.c.l.b16 %v366
      %v555 = vunpack.c.h.b16 %v366
      %v556 = vunpack.c.l.b16 %v367
      %v557 = vunpack.c.h.b16 %v367
      %v558 = vunpack.c.l.b16 %v368
      %v559 = vunpack.c.h.b16 %v368
      %v560 = vunpack.c.l.b16 %v369
      %v561 = vunpack.c.h.b16 %v369
      %v562 = vunpack.c.l.b16 %v370
      %v563 = vunpack.c.h.b16 %v370
      %v564 = vunpack.c.l.b16 %v371
      %v565 = vunpack.c.h.b16 %v371
      %v566 = vunpack.c.l.b16 %v372
      %v567 = vunpack.c.h.b16 %v372
      %v568 = vunpack.c.l.b16 %v373
      %v569 = vunpack.c.h.b16 %v373
      %v570 = vunpack.c.l.b16 %v374
      %v571 = vunpack.c.h.b16 %v374
      %v572 = vunpack.c.l.b16 %v375
      %v573 = vunpack.c.h.b16 %v375
      %v574 = vunpack.c.l.b16 %v376
      %v575 = vunpack.c.h.b16 %v376
      %v576 = vunpack.c.l.b16 %v377
      %v577 = vunpack.c.h.b16 %v377
      %v578 = vunpack.c.l.b16 %v378
      %v579 = vunpack.c.h.b16 %v378
      %v580 = vunpack.c.l.b16 %v379
      %v581 = vunpack.c.h.b16 %v379
      %v582 = vunpack.c.l.b16 %v380
      %v583 = vunpack.c.h.b16 %v380
      %v584 = vunpack.c.l.b16 %v381
      %v585 = vunpack.c.h.b16 %v381
      %v586 = vunpack.c.l.b16 %v382
      %v587 = vunpack.c.h.b16 %v382
      %v588 = vunpack.c.l.b16 %v383
      %v589 = vunpack.c.h.b16 %v383
      %v590 = vunpack.c.l.b16 %v384
      %v591 = vunpack.c.h.b16 %v384
      %v592 = vunpack.c.l.b16 %v385
      %v593 = vunpack.c.h.b16 %v385
      %v594 = vunpack.c.l.b16 %v386
      %v595 = vunpack.c.h.b16 %v386
      %v596 = vunpack.c.l.b16 %v387
      %v597 = vunpack.c.h.b16 %v387
      %v598 = vunpack.c.l.b16 %v388
      %v599 = vunpack.c.h.b16 %v388
      %v600 = vunpack.c.l.b16 %v389
      %v601 = vunpack.c.h.b16 %v389
      %v602 = vunpack.c.l.b16 %v390
      %v603 = vunpack.c.h.b16 %v390
      %v604 = vunpack.c.l.b16 %v391
      %v605 = vunpack.c.h.b16 %v391
      %v606 = vunpack.c.l.b16 %v392
      %v607 = vunpack.c.h.b16 %v392
      %v608 = vunpack.c.l.b16 %v393
      %v609 = vunpack.c.h.b16 %v393
      %v610 = vunpack.c.l.b16 %v394
      %v611 = vunpack.c.h.b16 %v394
      %v612 = vunpack.c.l.b16 %v395
      %v613 = vunpack.c.h.b16 %v395
      %v614 = vunpack.c.l.b16 %v396
      %v615 = vunpack.c.h.b16 %v396
      %v616 = vunpack.c.l.b16 %v397
      %v617 = vunpack.c.h.b16 %v397
      %v618 = vunpack.c.l.b16 %v398
      %v619 = vunpack.c.h.b16 %v398
      %v620 = vunpack.c.l.b16 %v399
      %v621 = vunpack.c.h.b16 %v399
      %v622 = vunpack.c.l.b16 %v400
      %v623 = vunpack.c.h.b16 %v400
      %v624 = vunpack.c.l.b16 %v401
      %v625 = vunpack.c.h.b16 %v401
      %v626 = vpack.c.b16 %v502, %v498
      %v627 = vpack.c.b16 %v503, %v499
      %v628 = vpack.c.b16 %v504, %v500
      %v629 = vpack.c.b16 %v505, %v501
      %v630 = vpack.c.b16 %v510, %v506
      %v631 = vpack.c.b16 %v511, %v507
      %v632 = vpack.c.b16 %v512, %v508
      %v633 = vpack.c.b16 %v513, %v509
      %v634 = vpack.c.b16 %v518, %v514
      %v635 = vpack.c.b16 %v519, %v515
      %v636 = vpack.c.b16 %v520, %v516
      %v637 = vpack.c.b16 %v521, %v517
      %v638 = vpack.c.b16 %v526, %v522
      %v639 = vpack.c.b16 %v527, %v523
      %v640 = vpack.c.b16 %v528, %v524
      %v641 = vpack.c.b16 %v529, %v525
      %v642 = vpack.c.b16 %v534, %v530
      %v643 = vpack.c.b16 %v535, %v531
      %v644 = vpack.c.b16 %v536, %v532
      %v645 = vpack.c.b16 %v537, %v533
      %v646 = vpack.c.b16 %v542, %v538
      %v647 = vpack.c.b16 %v543, %v539
      %v648 = vpack.c.b16 %v544, %v540
      %v649 = vpack.c.b16 %v545, %v541
      %v650 = vpack.c.b16 %v550, %v546
      %v651 = vpack.c.b16 %v551, %v547
      %v652 = vpack.c.b16 %v552, %v548
      %v653 = vpack.c.b16 %v553, %v549
      %v654 = vpack.c.b16 %v558, %v554
      %v655 = vpack.c.b16 %v559, %v555
      %v656 = vpack.c.b16 %v560, %v556
      %v657 = vpack.c.b16 %v561, %v557
      %v658 = vpack.c.b16 %v566, %v562
      %v659 = vpack.c.b16 %v567, %v563
      %v660 = vpack.c.b16 %v568, %v564
      %v661 = vpack.c.b16 %v569, %v565
      %v662 = vpack.c.b16 %v574, %v570
      %v663 = vpack.c.b16 %v575, %v571
      %v664 = vpack.c.b16 %v576, %v572
      %v665 = vpack.c.b16 %v577, %v573
      %v666 = vpack.c.b16 %v582, %v578
      %v667 = vpack.c.b16 %v583, %v579
      %v668 = vpack.c.b16 %v584, %v580
      %v669 = vpack.c.b16 %v585, %v581
      %v670 = vpack.c.b16 %v590, %v586
      %v671 = vpack.c.b16 %v591, %v587
      %v672 = vpack.c.b16 %v592, %v588
      %v673 = vpack.c.b16 %v593, %v589
      %v674 = vpack.c.b16 %v598, %v594
      %v675 = vpack.c.b16 %v599, %v595
      %v676 = vpack.c.b16 %v600, %v596
      %v677 = vpack.c.b16 %v601, %v597
      %v678 = vpack.c.b16 %v606, %v602
      %v679 = vpack.c.b16 %v607, %v603
      %v680 = vpack.c.b16 %v608, %v604
      %v681 = vpack.c.b16 %v609, %v605
      %v682 = vpack.c.b16 %v614, %v610
      %v683 = vpack.c.b16 %v615, %v611
      %v684 = vpack.c.b16 %v616, %v612
      %v685 = vpack.c.b16 %v617, %v613
      %v686 = vpack.c.b16 %v622, %v618
      %v687 = vpack.c.b16 %v623, %v619
      %v688 = vpack.c.b16 %v624, %v620
      %v689 = vpack.c.b16 %v625, %v621
      %754 = vmatprep.subr.bf16.mxu0 %v655
      %755 = vmatpush1.bf16.msra.mxu0 %v654
      %756 = vmatprep.subr.bf16.mxu0 %v651
      %757 = vmatpush1.bf16.msra.mxu0 %v650
      %758 = vmatprep.subr.bf16.mxu0 %v647
      %759 = vmatpush1.bf16.msra.mxu0 %v646
      %760 = vmatprep.subr.bf16.mxu0 %v643
      %761 = vmatpush1.bf16.msra.mxu0 %v642
      %762 = vmatprep.subr.bf16.mxu0 %v639
      %763 = vmatpush1.bf16.msra.mxu0 %v638
      %764 = vmatprep.subr.bf16.mxu0 %v635
      %765 = vmatpush1.bf16.msra.mxu0 %v634
      %766 = vmatprep.subr.bf16.mxu0 %v631
      %767 = vmatpush1.bf16.msra.mxu0 %v630
      %768 = vmatprep.subr.bf16.mxu0 %v627
      %769 = vmatpush1.bf16.msra.mxu0 %v626
      %770 = vmatprep.subr.bf16.mxu0 %v687
      %771 = vmatpush2.bf16.msra.mxu0 %v686
      %772 = vmatprep.subr.bf16.mxu0 %v683
      %773 = vmatpush2.bf16.msra.mxu0 %v682
      %774 = vmatprep.subr.bf16.mxu0 %v679
      %775 = vmatpush2.bf16.msra.mxu0 %v678
      %776 = vmatprep.subr.bf16.mxu0 %v675
      %777 = vmatpush2.bf16.msra.mxu0 %v674
      %778 = vmatprep.subr.bf16.mxu0 %v671
      %779 = vmatpush2.bf16.msra.mxu0 %v670
      %780 = vmatprep.subr.bf16.mxu0 %v667
      %781 = vmatpush2.bf16.msra.mxu0 %v666
      %782 = vmatprep.subr.bf16.mxu0 %v663
      %783 = vmatpush2.bf16.msra.mxu0 %v662
      %784 = vmatprep.subr.bf16.mxu0 %v659
      %785 = vmatpush2.bf16.msra.mxu0 %v658
      %786 = vmatprep.mubr.bf16.mxu0 %v431
      %787 = vmatmul.mubr.bf16.gmra.mxu0 %v430
      %v788 = vpop.f32.mrf.mxu0
      %v789 = vadd.f32 %v407, %v788
      %v790 = vpop.f32.mrf.mxu0
      %v791 = vadd.f32 %v411, %v790
      %v792 = vpop.f32.mrf.mxu0
      %v793 = vadd.f32 %v407, %v792
      %v794 = vpop.f32.mrf.mxu0
      %v795 = vadd.f32 %v411, %v794
      %796 = vdwg.mxu0
      %797 = vmatprep.subr.bf16.mxu0 %v657
      %798 = vmatpush1.bf16.msra.mxu0 %v656
      %799 = vmatprep.subr.bf16.mxu0 %v653
      %800 = vmatpush1.bf16.msra.mxu0 %v652
      %801 = vmatprep.subr.bf16.mxu0 %v649
      %802 = vmatpush1.bf16.msra.mxu0 %v648
      %803 = vmatprep.subr.bf16.mxu0 %v645
      %804 = vmatpush1.bf16.msra.mxu0 %v644
      %805 = vmatprep.subr.bf16.mxu0 %v641
      %806 = vmatpush1.bf16.msra.mxu0 %v640
      %807 = vmatprep.subr.bf16.mxu0 %v637
      %808 = vmatpush1.bf16.msra.mxu0 %v636
      %809 = vmatprep.subr.bf16.mxu0 %v633
      %810 = vmatpush1.bf16.msra.mxu0 %v632
      %811 = vmatprep.subr.bf16.mxu0 %v629
      %812 = vmatpush1.bf16.msra.mxu0 %v628
      %813 = vmatprep.subr.bf16.mxu0 %v689
      %814 = vmatpush2.bf16.msra.mxu0 %v688
      %815 = vmatprep.subr.bf16.mxu0 %v685
      %816 = vmatpush2.bf16.msra.mxu0 %v684
      %817 = vmatprep.subr.bf16.mxu0 %v681
      %818 = vmatpush2.bf16.msra.mxu0 %v680
      %819 = vmatprep.subr.bf16.mxu0 %v677
      %820 = vmatpush2.bf16.msra.mxu0 %v676
      %821 = vmatprep.subr.bf16.mxu0 %v673
      %822 = vmatpush2.bf16.msra.mxu0 %v672
      %823 = vmatprep.subr.bf16.mxu0 %v669
      %824 = vmatpush2.bf16.msra.mxu0 %v668
      %825 = vmatprep.subr.bf16.mxu0 %v665
      %826 = vmatpush2.bf16.msra.mxu0 %v664
      %827 = vmatprep.subr.bf16.mxu0 %v661
      %828 = vmatpush2.bf16.msra.mxu0 %v660
      %829 = vmatprep.mubr.bf16.mxu0 %v431
      %830 = vmatmul.mubr.bf16.gmra.mxu0 %v430
      %v831 = vpop.f32.mrf.mxu0
      %v832 = vadd.f32 %v415, %v831
      %v833 = vpop.f32.mrf.mxu0
      %v834 = vadd.f32 %v419, %v833
      %v835 = vpop.f32.mrf.mxu0
      %v836 = vadd.f32 %v415, %v835
      %v837 = vpop.f32.mrf.mxu0
      %v838 = vadd.f32 %v419, %v837
      %839 = vdwg.mxu0
      %v840 = vmax.f32 %v789, 0.0
      %v841 = vmax.f32 %v791, 0.0
      %v842 = vmax.f32 %v832, 0.0
      %v843 = vmax.f32 %v834, 0.0
      %v844 = vmax.f32 %v793, 0.0
      %v845 = vmax.f32 %v795, 0.0
      %v846 = vmax.f32 %v836, 0.0
      %v847 = vmax.f32 %v838, 0.0
      %v848 = vld [vmem:[%s4] sm:$0xff]
      %v849 = vld [vmem:[%s4 + $0x8] sm:$0xff]
      %v850 = vld [vmem:[%s4 + $0x10] sm:$0xff]
      %v851 = vld [vmem:[%s4 + $0x18] sm:$0xff]
      %v852 = vld [vmem:[%s4 + $0x20] sm:$0xff]
      %v853 = vld [vmem:[%s4 + $0x28] sm:$0xff]
      %v854 = vld [vmem:[%s4 + $0x30] sm:$0xff]
      %v855 = vld [vmem:[%s4 + $0x38] sm:$0xff]
      %v856 = vld [vmem:[%s4 + $0x40] sm:$0xff]
      %v857 = vld [vmem:[%s4 + $0x48] sm:$0xff]
      %v858 = vld [vmem:[%s4 + $0x50] sm:$0xff]
      %v859 = vld [vmem:[%s4 + $0x58] sm:$0xff]
      %v860 = vld [vmem:[%s4 + $0x60] sm:$0xff]
      %v861 = vld [vmem:[%s4 + $0x68] sm:$0xff]
      %v862 = vld [vmem:[%s4 + $0x70] sm:$0xff]
      %v863 = vld [vmem:[%s4 + $0x78] sm:$0xff]
      %v864 = vld [vmem:[%s4 + $0x80] sm:$0xff]
      %v865 = vld [vmem:[%s4 + $0x88] sm:$0xff]
      %v866 = vld [vmem:[%s4 + $0x90] sm:$0xff]
      %v867 = vld [vmem:[%s4 + $0x98] sm:$0xff]
      %v868 = vld [vmem:[%s4 + $0xa0] sm:$0xff]
      %v869 = vld [vmem:[%s4 + $0xa8] sm:$0xff]
      %v870 = vld [vmem:[%s4 + $0xb0] sm:$0xff]
      %v871 = vld [vmem:[%s4 + $0xb8] sm:$0xff]
      %v872 = vld [vmem:[%s4 + $0xc0] sm:$0xff]
      %v873 = vld [vmem:[%s4 + $0xc8] sm:$0xff]
      %v874 = vld [vmem:[%s4 + $0xd0] sm:$0xff]
      %v875 = vld [vmem:[%s4 + $0xd8] sm:$0xff]
      %v876 = vld [vmem:[%s4 + $0xe0] sm:$0xff]
      %v877 = vld [vmem:[%s4 + $0xe8] sm:$0xff]
      %v878 = vld [vmem:[%s4 + $0xf0] sm:$0xff]
      %v879 = vld [vmem:[%s4 + $0xf8] sm:$0xff]
      %v880 = vld [vmem:[%s4 + $0x100] sm:$0xff]
      %v881 = vld [vmem:[%s4 + $0x108] sm:$0xff]
      %v882 = vld [vmem:[%s4 + $0x110] sm:$0xff]
      %v883 = vld [vmem:[%s4 + $0x118] sm:$0xff]
      %v884 = vld [vmem:[%s4 + $0x120] sm:$0xff]
      %v885 = vld [vmem:[%s4 + $0x128] sm:$0xff]
      %v886 = vld [vmem:[%s4 + $0x130] sm:$0xff]
      %v887 = vld [vmem:[%s4 + $0x138] sm:$0xff]
      %v888 = vld [vmem:[%s4 + $0x140] sm:$0xff]
      %v889 = vld [vmem:[%s4 + $0x148] sm:$0xff]
      %v890 = vld [vmem:[%s4 + $0x150] sm:$0xff]
      %v891 = vld [vmem:[%s4 + $0x158] sm:$0xff]
      %v892 = vld [vmem:[%s4 + $0x160] sm:$0xff]
      %v893 = vld [vmem:[%s4 + $0x168] sm:$0xff]
      %v894 = vld [vmem:[%s4 + $0x170] sm:$0xff]
      %v895 = vld [vmem:[%s4 + $0x178] sm:$0xff]
      %v896 = vld [vmem:[%s4 + $0x180] sm:$0xff]
      %v897 = vld [vmem:[%s4 + $0x188] sm:$0xff]
      %v898 = vld [vmem:[%s4 + $0x190] sm:$0xff]
      %v899 = vld [vmem:[%s4 + $0x198] sm:$0xff]
      %v900 = vld [vmem:[%s4 + $0x1a0] sm:$0xff]
      %v901 = vld [vmem:[%s4 + $0x1a8] sm:$0xff]
      %v902 = vld [vmem:[%s4 + $0x1b0] sm:$0xff]
      %v903 = vld [vmem:[%s4 + $0x1b8] sm:$0xff]
      %v904 = vld [vmem:[%s4 + $0x1c0] sm:$0xff]
      %v905 = vld [vmem:[%s4 + $0x1c8] sm:$0xff]
      %v906 = vld [vmem:[%s4 + $0x1d0] sm:$0xff]
      %v907 = vld [vmem:[%s4 + $0x1d8] sm:$0xff]
      %v908 = vld [vmem:[%s4 + $0x1e0] sm:$0xff]
      %v909 = vld [vmem:[%s4 + $0x1e8] sm:$0xff]
      %v910 = vld [vmem:[%s4 + $0x1f0] sm:$0xff]
      %v911 = vld [vmem:[%s4 + $0x1f8] sm:$0xff]
      %v912 = vld [vmem:[%s4 + $0x200] sm:$0xff]
      %v913 = vld [vmem:[%s4 + $0x208] sm:$0xff]
      %v914 = vld [vmem:[%s4 + $0x210] sm:$0xff]
      %v915 = vld [vmem:[%s4 + $0x218] sm:$0xff]
      %v916 = vld [vmem:[%s4 + $0x220] sm:$0xff]
      %v917 = vld [vmem:[%s4 + $0x228] sm:$0xff]
      %v918 = vld [vmem:[%s4 + $0x230] sm:$0xff]
      %v919 = vld [vmem:[%s4 + $0x238] sm:$0xff]
      %v920 = vld [vmem:[%s4 + $0x240] sm:$0xff]
      %v921 = vld [vmem:[%s4 + $0x248] sm:$0xff]
      %v922 = vld [vmem:[%s4 + $0x250] sm:$0xff]
      %v923 = vld [vmem:[%s4 + $0x258] sm:$0xff]
      %v924 = vld [vmem:[%s4 + $0x260] sm:$0xff]
      %v925 = vld [vmem:[%s4 + $0x268] sm:$0xff]
      %v926 = vld [vmem:[%s4 + $0x270] sm:$0xff]
      %v927 = vld [vmem:[%s4 + $0x278] sm:$0xff]
      %v928 = vld [vmem:[%s4 + $0x280] sm:$0xff]
      %v929 = vld [vmem:[%s4 + $0x288] sm:$0xff]
      %v930 = vld [vmem:[%s4 + $0x290] sm:$0xff]
      %v931 = vld [vmem:[%s4 + $0x298] sm:$0xff]
      %v932 = vld [vmem:[%s4 + $0x2a0] sm:$0xff]
      %v933 = vld [vmem:[%s4 + $0x2a8] sm:$0xff]
      %v934 = vld [vmem:[%s4 + $0x2b0] sm:$0xff]
      %v935 = vld [vmem:[%s4 + $0x2b8] sm:$0xff]
      %v936 = vld [vmem:[%s4 + $0x2c0] sm:$0xff]
      %v937 = vld [vmem:[%s4 + $0x2c8] sm:$0xff]
      %v938 = vld [vmem:[%s4 + $0x2d0] sm:$0xff]
      %v939 = vld [vmem:[%s4 + $0x2d8] sm:$0xff]
      %v940 = vld [vmem:[%s4 + $0x2e0] sm:$0xff]
      %v941 = vld [vmem:[%s4 + $0x2e8] sm:$0xff]
      %v942 = vld [vmem:[%s4 + $0x2f0] sm:$0xff]
      %v943 = vld [vmem:[%s4 + $0x2f8] sm:$0xff]
      %v944 = vld [vmem:[%s4 + $0x300] sm:$0xff]
      %v945 = vld [vmem:[%s4 + $0x308] sm:$0xff]
      %v946 = vld [vmem:[%s4 + $0x310] sm:$0xff]
      %v947 = vld [vmem:[%s4 + $0x318] sm:$0xff]
      %v948 = vld [vmem:[%s4 + $0x320] sm:$0xff]
      %v949 = vld [vmem:[%s4 + $0x328] sm:$0xff]
      %v950 = vld [vmem:[%s4 + $0x330] sm:$0xff]
      %v951 = vld [vmem:[%s4 + $0x338] sm:$0xff]
      %v952 = vld [vmem:[%s4 + $0x340] sm:$0xff]
      %v953 = vld [vmem:[%s4 + $0x348] sm:$0xff]
      %v954 = vld [vmem:[%s4 + $0x350] sm:$0xff]
      %v955 = vld [vmem:[%s4 + $0x358] sm:$0xff]
      %v956 = vld [vmem:[%s4 + $0x360] sm:$0xff]
      %v957 = vld [vmem:[%s4 + $0x368] sm:$0xff]
      %v958 = vld [vmem:[%s4 + $0x370] sm:$0xff]
      %v959 = vld [vmem:[%s4 + $0x378] sm:$0xff]
      %v960 = vld [vmem:[%s4 + $0x380] sm:$0xff]
      %v961 = vld [vmem:[%s4 + $0x388] sm:$0xff]
      %v962 = vld [vmem:[%s4 + $0x390] sm:$0xff]
      %v963 = vld [vmem:[%s4 + $0x398] sm:$0xff]
      %v964 = vld [vmem:[%s4 + $0x3a0] sm:$0xff]
      %v965 = vld [vmem:[%s4 + $0x3a8] sm:$0xff]
      %v966 = vld [vmem:[%s4 + $0x3b0] sm:$0xff]
      %v967 = vld [vmem:[%s4 + $0x3b8] sm:$0xff]
      %v968 = vld [vmem:[%s4 + $0x3c0] sm:$0xff]
      %v969 = vld [vmem:[%s4 + $0x3c8] sm:$0xff]
      %v970 = vld [vmem:[%s4 + $0x3d0] sm:$0xff]
      %v971 = vld [vmem:[%s4 + $0x3d8] sm:$0xff]
      %v972 = vld [vmem:[%s4 + $0x3e0] sm:$0xff]
      %v973 = vld [vmem:[%s4 + $0x3e8] sm:$0xff]
      %v974 = vld [vmem:[%s4 + $0x3f0] sm:$0xff]
      %v975 = vld [vmem:[%s4 + $0x3f8] sm:$0xff]
      %v976 = vld [vmem:[%s5] sm:$0x3]
      %v978 = vlaneseq
      %v979 = vshrl.u32 %v978, 7
      %v980 = vsub.s32 0, %v979
      %v981 = vrot.slane %v976, %v980
      %v982 = vlaneseq
      %v983 = vshrl.u32 %v982, 7
      %v984 = vsub.s32 1, %v983
      %v985 = vrot.slane %v976, %v984
      %988 = vmatprep.subr.mxu0 %v879
      %989 = vmatpush1.msra.mxu0 %v878
      %990 = vmatprep.subr.mxu0 %v877
      %991 = vmatpush1.msra.mxu0 %v876
      %992 = vmatprep.subr.mxu0 %v875
      %993 = vmatpush1.msra.mxu0 %v874
      %994 = vmatprep.subr.mxu0 %v873
      %995 = vmatpush1.msra.mxu0 %v872
      %996 = vmatprep.subr.mxu0 %v871
      %997 = vmatpush1.msra.mxu0 %v870
      %998 = vmatprep.subr.mxu0 %v869
      %999 = vmatpush1.msra.mxu0 %v868
      %1000 = vmatprep.subr.mxu0 %v867
      %1001 = vmatpush1.msra.mxu0 %v866
      %1002 = vmatprep.subr.mxu0 %v865
      %1003 = vmatpush1.msra.mxu0 %v864
      %1004 = vmatprep.subr.mxu0 %v863
      %1005 = vmatpush1.msra.mxu0 %v862
      %1006 = vmatprep.subr.mxu0 %v861
      %1007 = vmatpush1.msra.mxu0 %v860
      %1008 = vmatprep.subr.mxu0 %v859
      %1009 = vmatpush1.msra.mxu0 %v858
      %1010 = vmatprep.subr.mxu0 %v857
      %1011 = vmatpush1.msra.mxu0 %v856
      %1012 = vmatprep.subr.mxu0 %v855
      %1013 = vmatpush1.msra.mxu0 %v854
      %1014 = vmatprep.subr.mxu0 %v853
      %1015 = vmatpush1.msra.mxu0 %v852
      %1016 = vmatprep.subr.mxu0 %v851
      %1017 = vmatpush1.msra.mxu0 %v850
      %1018 = vmatprep.subr.mxu0 %v849
      %1019 = vmatpush1.msra.mxu0 %v848
      %1020 = vmatprep.subr.mxu0 %v911
      %1021 = vmatpush2.msra.mxu0 %v910
      %1022 = vmatprep.subr.mxu0 %v909
      %1023 = vmatpush2.msra.mxu0 %v908
      %1024 = vmatprep.subr.mxu0 %v907
      %1025 = vmatpush2.msra.mxu0 %v906
      %1026 = vmatprep.subr.mxu0 %v905
      %1027 = vmatpush2.msra.mxu0 %v904
      %1028 = vmatprep.subr.mxu0 %v903
      %1029 = vmatpush2.msra.mxu0 %v902
      %1030 = vmatprep.subr.mxu0 %v901
      %1031 = vmatpush2.msra.mxu0 %v900
      %1032 = vmatprep.subr.mxu0 %v899
      %1033 = vmatpush2.msra.mxu0 %v898
      %1034 = vmatprep.subr.mxu0 %v897
      %1035 = vmatpush2.msra.mxu0 %v896
      %1036 = vmatprep.subr.mxu0 %v895
      %1037 = vmatpush2.msra.mxu0 %v894
      %1038 = vmatprep.subr.mxu0 %v893
      %1039 = vmatpush2.msra.mxu0 %v892
      %1040 = vmatprep.subr.mxu0 %v891
      %1041 = vmatpush2.msra.mxu0 %v890
      %1042 = vmatprep.subr.mxu0 %v889
      %1043 = vmatpush2.msra.mxu0 %v888
      %1044 = vmatprep.subr.mxu0 %v887
      %1045 = vmatpush2.msra.mxu0 %v886
      %1046 = vmatprep.subr.mxu0 %v885
      %1047 = vmatpush2.msra.mxu0 %v884
      %1048 = vmatprep.subr.mxu0 %v883
      %1049 = vmatpush2.msra.mxu0 %v882
      %1050 = vmatprep.subr.mxu0 %v881
      %1051 = vmatpush2.msra.mxu0 %v880
      %1052 = vmatprep.mubr.f32.mxu0 %v841
      %1053 = vmatmul.mubr.f32.gmra.mxu0 %v840
      %v1054 = vpop.f32.mrf.mxu0
      %v1055 = vadd.f32 %v981, %v1054
      %v1056 = vpop.f32.mrf.mxu0
      %v1057 = vadd.f32 %v985, %v1056
      %1058 = vmatprep.mubr.f32.mxu0 %v845
      %1059 = vmatmul.mubr.f32.gmra.mxu0 %v844
      %v1060 = vpop.f32.mrf.mxu0
      %v1061 = vadd.f32 %v981, %v1060
      %v1062 = vpop.f32.mrf.mxu0
      %v1063 = vadd.f32 %v985, %v1062
      %1064 = vdwg.mxu0
      %1065 = vmatprep.subr.mxu0 %v943
      %1066 = vmatpush1.msra.mxu0 %v942
      %1067 = vmatprep.subr.mxu0 %v941
      %1068 = vmatpush1.msra.mxu0 %v940
      %1069 = vmatprep.subr.mxu0 %v939
      %1070 = vmatpush1.msra.mxu0 %v938
      %1071 = vmatprep.subr.mxu0 %v937
      %1072 = vmatpush1.msra.mxu0 %v936
      %1073 = vmatprep.subr.mxu0 %v935
      %1074 = vmatpush1.msra.mxu0 %v934
      %1075 = vmatprep.subr.mxu0 %v933
      %1076 = vmatpush1.msra.mxu0 %v932
      %1077 = vmatprep.subr.mxu0 %v931
      %1078 = vmatpush1.msra.mxu0 %v930
      %1079 = vmatprep.subr.mxu0 %v929
      %1080 = vmatpush1.msra.mxu0 %v928
      %1081 = vmatprep.subr.mxu0 %v927
      %1082 = vmatpush1.msra.mxu0 %v926
      %1083 = vmatprep.subr.mxu0 %v925
      %1084 = vmatpush1.msra.mxu0 %v924
      %1085 = vmatprep.subr.mxu0 %v923
      %1086 = vmatpush1.msra.mxu0 %v922
      %1087 = vmatprep.subr.mxu0 %v921
      %1088 = vmatpush1.msra.mxu0 %v920
      %1089 = vmatprep.subr.mxu0 %v919
      %1090 = vmatpush1.msra.mxu0 %v918
      %1091 = vmatprep.subr.mxu0 %v917
      %1092 = vmatpush1.msra.mxu0 %v916
      %1093 = vmatprep.subr.mxu0 %v915
      %1094 = vmatpush1.msra.mxu0 %v914
      %1095 = vmatprep.subr.mxu0 %v913
      %1096 = vmatpush1.msra.mxu0 %v912
      %1097 = vmatprep.subr.mxu0 %v975
      %1098 = vmatpush2.msra.mxu0 %v974
      %1099 = vmatprep.subr.mxu0 %v973
      %1100 = vmatpush2.msra.mxu0 %v972
      %1101 = vmatprep.subr.mxu0 %v971
      %1102 = vmatpush2.msra.mxu0 %v970
      %1103 = vmatprep.subr.mxu0 %v969
      %1104 = vmatpush2.msra.mxu0 %v968
      %1105 = vmatprep.subr.mxu0 %v967
      %1106 = vmatpush2.msra.mxu0 %v966
      %1107 = vmatprep.subr.mxu0 %v965
      %1108 = vmatpush2.msra.mxu0 %v964
      %1109 = vmatprep.subr.mxu0 %v963
      %1110 = vmatpush2.msra.mxu0 %v962
      %1111 = vmatprep.subr.mxu0 %v961
      %1112 = vmatpush2.msra.mxu0 %v960
      %1113 = vmatprep.subr.mxu0 %v959
      %1114 = vmatpush2.msra.mxu0 %v958
      %1115 = vmatprep.subr.mxu0 %v957
      %1116 = vmatpush2.msra.mxu0 %v956
      %1117 = vmatprep.subr.mxu0 %v955
      %1118 = vmatpush2.msra.mxu0 %v954
      %1119 = vmatprep.subr.mxu0 %v953
      %1120 = vmatpush2.msra.mxu0 %v952
      %1121 = vmatprep.subr.mxu0 %v951
      %1122 = vmatpush2.msra.mxu0 %v950
      %1123 = vmatprep.subr.mxu0 %v949
      %1124 = vmatpush2.msra.mxu0 %v948
      %1125 = vmatprep.subr.mxu0 %v947
      %1126 = vmatpush2.msra.mxu0 %v946
      %1127 = vmatprep.subr.mxu0 %v945
      %1128 = vmatpush2.msra.mxu0 %v944
      %1129 = vmatprep.mubr.f32.mxu0 %v843
      %1130 = vmatmul.mubr.f32.gmra.mxu0 %v842
      %v1131 = vpop.f32.mrf.mxu0
      %v1132 = vadd.f32 %v1055, %v1131
      %v1133 = vpop.f32.mrf.mxu0
      %v1134 = vadd.f32 %v1057, %v1133
      %1135 = vmatprep.mubr.f32.mxu0 %v847
      %1136 = vmatmul.mubr.f32.gmra.mxu0 %v846
      %v1137 = vpop.f32.mrf.mxu0
      %v1138 = vadd.f32 %v1061, %v1137
      %v1139 = vpop.f32.mrf.mxu0
      %v1140 = vadd.f32 %v1063, %v1139
      %1141 = vdwg.mxu0
      %v1142 = vld [vmem:[%s327] sm:$0xff]
      %v1143 = vld [vmem:[%s327 + $0x8] sm:$0xff]
      %v1144 = vld [vmem:[%s6] sm:$0xff]
      %v1145 = vld [vmem:[%s6 + $0x8] sm:$0xff]
      %v1146 = vld [vmem:[%s6 + $0x10] sm:$0xff]
      %v1147 = vld [vmem:[%s6 + $0x18] sm:$0xff]
      %v1148 = vld [vmem:[%s6 + $0x20] sm:$0xff]
      %v1149 = vld [vmem:[%s6 + $0x28] sm:$0xff]
      %vm1150 = vcmask 195584
      %v1152 = vsel %vm1150, %v1142, 0
      %v1155 = vsel %vm1150, %v1143, 0
      %1157 = vmatprep.subr.mxu0 0.0
      %1158 = vmatpush1.msra.mxu0 0.0
      %1159 = vmatprep.subr.mxu0 0.0
      %1160 = vmatpush1.msra.mxu0 0.0
      %1161 = vmatprep.subr.mxu0 0.0
      %1162 = vmatpush1.msra.mxu0 0.0
      %1163 = vmatprep.subr.mxu0 0.0
      %1164 = vmatpush1.msra.mxu0 0.0
      %1165 = vmatprep.subr.mxu0 0.0
      %1166 = vmatpush1.msra.mxu0 0.0
      %1167 = vmatprep.subr.mxu0 0.0
      %1168 = vmatpush1.msra.mxu0 0.0
      %1169 = vmatprep.subr.mxu0 0.0
      %1170 = vmatpush1.msra.mxu0 0.0
      %1171 = vmatprep.subr.mxu0 0.0
      %1172 = vmatpush1.msra.mxu0 0.0
      %1173 = vmatprep.subr.mxu0 0.0
      %1174 = vmatpush1.msra.mxu0 0.0
      %1175 = vmatprep.subr.mxu0 0.0
      %1176 = vmatpush1.msra.mxu0 0.0
      %1177 = vmatprep.subr.mxu0 0.0
      %1178 = vmatpush1.msra.mxu0 0.0
      %1179 = vmatprep.subr.mxu0 0.0
      %1180 = vmatpush1.msra.mxu0 0.0
      %1181 = vmatprep.subr.mxu0 0.0
      %1182 = vmatpush1.msra.mxu0 0.0
      %1183 = vmatprep.subr.mxu0 %v1149
      %1184 = vmatpush1.msra.mxu0 %v1148
      %1185 = vmatprep.subr.mxu0 %v1147
      %1186 = vmatpush1.msra.mxu0 %v1146
      %1187 = vmatprep.subr.mxu0 %v1145
      %1188 = vmatpush1.msra.mxu0 %v1144
      %1189 = vmatprep.subr.mxu0 0.0
      %1190 = vmatpush2.msra.mxu0 0.0
      %1191 = vmatprep.subr.mxu0 0.0
      %1192 = vmatpush2.msra.mxu0 0.0
      %1193 = vmatprep.subr.mxu0 0.0
      %1194 = vmatpush2.msra.mxu0 0.0
      %1195 = vmatprep.subr.mxu0 0.0
      %1196 = vmatpush2.msra.mxu0 0.0
      %1197 = vmatprep.subr.mxu0 0.0
      %1198 = vmatpush2.msra.mxu0 0.0
      %1199 = vmatprep.subr.mxu0 0.0
      %1200 = vmatpush2.msra.mxu0 0.0
      %1201 = vmatprep.subr.mxu0 0.0
      %1202 = vmatpush2.msra.mxu0 0.0
      %1203 = vmatprep.subr.mxu0 0.0
      %1204 = vmatpush2.msra.mxu0 0.0
      %1205 = vmatprep.subr.mxu0 0.0
      %1206 = vmatpush2.msra.mxu0 0.0
      %1207 = vmatprep.subr.mxu0 0.0
      %1208 = vmatpush2.msra.mxu0 0.0
      %1209 = vmatprep.subr.mxu0 0.0
      %1210 = vmatpush2.msra.mxu0 0.0
      %1211 = vmatprep.subr.mxu0 0.0
      %1212 = vmatpush2.msra.mxu0 0.0
      %1213 = vmatprep.subr.mxu0 0.0
      %1214 = vmatpush2.msra.mxu0 0.0
      %1215 = vmatprep.subr.mxu0 0.0
      %1216 = vmatpush2.msra.mxu0 0.0
      %1217 = vmatprep.subr.mxu0 0.0
      %1218 = vmatpush2.msra.mxu0 0.0
      %1219 = vmatprep.subr.mxu0 0.0
      %1220 = vmatpush2.msra.mxu0 0.0
      %1221 = vmatprep.mubr.f32.mxu0 0.0
      %1222 = vmatmul.mubr.f32.gmra.mxu0 %v1152
      %v1223 = vpop.f32.mrf.mxu0
      %v1224 = vadd.f32 0.0, %v1223
      %v1225 = vpop.f32.mrf.mxu0
      %v1226 = vadd.f32 0.0, %v1225
      %1227 = vmatprep.mubr.f32.mxu0 0.0
      %1228 = vmatmul.mubr.f32.gmra.mxu0 %v1155
      %v1229 = vpop.f32.mrf.mxu0
      %v1230 = vadd.f32 0.0, %v1229
      %v1231 = vpop.f32.mrf.mxu0
      %v1232 = vadd.f32 0.0, %v1231
      %1233 = vdwg.mxu0
      %v1234 = vadd.f32 %v1132, %v1224
      %v1235 = vadd.f32 %v1134, %v1226
      %v1236 = vadd.f32 %v1138, %v1230
      %v1237 = vadd.f32 %v1140, %v1232
      %v1238 = vmax.f32 %v1234, 0.0
      %v1239 = vmax.f32 %v1235, 0.0
      %v1240 = vmax.f32 %v1236, 0.0
      %v1241 = vmax.f32 %v1237, 0.0
      %vm1242 = vcmp.ne.f32.partialorder %v1234, %v1234
      %vm1243 = vcmp.ne.f32.partialorder %v1235, %v1235
      %vm1244 = vcmp.ne.f32.partialorder %v1236, %v1236
      %vm1245 = vcmp.ne.f32.partialorder %v1237, %v1237
      %v1246 = vadd.f32 %v1234, 0.0
      %v1247 = vadd.f32 %v1235, 0.0
      %v1248 = vadd.f32 %v1236, 0.0
      %v1249 = vadd.f32 %v1237, 0.0
      %v1250 = vand.u32 2147483647, %v1234
      %v1251 = vand.u32 2147483647, %v1235
      %v1252 = vand.u32 2147483647, %v1236
      %v1253 = vand.u32 2147483647, %v1237
      %v1254 = vsub.f32 0.0, %v1250
      %v1255 = vsub.f32 0.0, %v1251
      %v1256 = vsub.f32 0.0, %v1252
      %v1257 = vsub.f32 0.0, %v1253
      %v1258 = vmul.f32 %v1254, 1.442695
      %v1259 = vpow.pop %v1258
      %v1260 = vmul.f32 %v1255, 1.442695
      %v1261 = vpow.pop %v1260
      %v1262 = vmul.f32 %v1256, 1.442695
      %v1263 = vpow.pop %v1262
      %v1264 = vmul.f32 %v1257, 1.442695
      %v1265 = vpow.pop %v1264
      %v1266 = vadd.f32 %v1259, 1.0
      %v1267 = vlog2.pop %v1266
      %v1268 = vmul.f32 %v1267, 0.6931472
      %v1269 = vmul.f32 -0.5, %v1259
      %v1270 = vadd.f32 %v1269, 1.0
      %v1271 = vmul.f32 %v1270, %v1259
      %v1272 = vand.u32 2147483647, %v1259
      %vm1273 = vcmp.lt.f32.partialorder %v1272, 0.0004427343
      %v1274 = vsel %vm1273, %v1271, %v1268
      %v1275 = vadd.f32 %v1261, 1.0
      %v1276 = vlog2.pop %v1275
      %v1277 = vmul.f32 %v1276, 0.6931472
      %v1278 = vmul.f32 -0.5, %v1261
      %v1279 = vadd.f32 %v1278, 1.0
      %v1280 = vmul.f32 %v1279, %v1261
      %v1281 = vand.u32 2147483647, %v1261
      %vm1282 = vcmp.lt.f32.partialorder %v1281, 0.0004427343
      %v1283 = vsel %vm1282, %v1280, %v1277
      %v1284 = vadd.f32 %v1263, 1.0
      %v1285 = vlog2.pop %v1284
      %v1286 = vmul.f32 %v1285, 0.6931472
      %v1287 = vmul.f32 -0.5, %v1263
      %v1288 = vadd.f32 %v1287, 1.0
      %v1289 = vmul.f32 %v1288, %v1263
      %v1290 = vand.u32 2147483647, %v1263
      %vm1291 = vcmp.lt.f32.partialorder %v1290, 0.0004427343
      %v1292 = vsel %vm1291, %v1289, %v1286
      %v1293 = vadd.f32 %v1265, 1.0
      %v1294 = vlog2.pop %v1293
      %v1295 = vmul.f32 %v1294, 0.6931472
      %v1296 = vmul.f32 -0.5, %v1265
      %v1297 = vadd.f32 %v1296, 1.0
      %v1298 = vmul.f32 %v1297, %v1265
      %v1299 = vand.u32 2147483647, %v1265
      %vm1300 = vcmp.lt.f32.partialorder %v1299, 0.0004427343
      %v1301 = vsel %vm1300, %v1298, %v1295
      %v1302 = vadd.f32 %v1238, %v1274
      %v1303 = vadd.f32 %v1239, %v1283
      %v1304 = vadd.f32 %v1240, %v1292
      %v1305 = vadd.f32 %v1241, %v1301
      %v1306 = vsel %vm1242, %v1246, %v1302
      %v1307 = vsel %vm1243, %v1247, %v1303
      %v1308 = vsel %vm1244, %v1248, %v1304
      %v1309 = vsel %vm1245, %v1249, %v1305
      %v1310 = vmax.f32 %v1306, 1e-12
      %v1311 = vmax.f32 %v1307, 1e-12
      %v1312 = vmax.f32 %v1308, 1e-12
      %v1313 = vmax.f32 %v1309, 1e-12
      %v1314 = vld [vmem:[%s7] sm:$0x3]
      %v1316 = vlaneseq
      %v1317 = vshrl.u32 %v1316, 7
      %v1318 = vsub.s32 0, %v1317
      %v1319 = vrot.slane %v1314, %v1318
      %v1320 = vlaneseq
      %v1321 = vshrl.u32 %v1320, 7
      %v1322 = vsub.s32 1, %v1321
      %v1323 = vrot.slane %v1314, %v1322
      %vm1326 = vcmp.gt.f32.partialorder %v1319, 0.5
      %vm1327 = vcmp.gt.f32.partialorder %v1323, 0.5
      %v1328 = vsel %vm1326, %v1310, %v1234
      %v1329 = vsel %vm1327, %v1311, %v1235
      %v1330 = vsel %vm1326, %v1312, %v1236
      %v1331 = vsel %vm1327, %v1313, %v1237
      %1332 = vst [vmem:[%s334] sm:$0xff] %v1328
      %vm1333 = vcmask 130048
      %1334 = vst.msk [vmem:[%s334 + $0x8] sm:$0xff] %vm1333, %v1329
      %1335 = vst [vmem:[%s334 + $0x10] sm:$0xff] %v1330
      %1336 = vst.msk [vmem:[%s334 + $0x18] sm:$0xff] %vm1333, %v1331
      %s1337 = smul.u32 2, %s19
      %p1338 = scmp.lt.s32.totalorder %s1337, 3
      %s1339 = scalar_select %p1338, %s1337, 3
      %s1340 = smul.addr %s1339, 2
      %s1341 = smul.addr %s1340, 8
      %s1342 = scalar_lea.vmem %s8, %s1341
      // Predicated region
      $region53: #{point_mixture_density_head_forward.1} parent=51 // pred_check
        %p1343 = pneg %p215
      $region54: #{point_mixture_density_head_forward.1} parent=51 // pred_check_branch
        %1345 = sbr.rel (%p1343) target = $region56
      $region55: #{point_mixture_density_head_forward.1} parent=51 // pred_region
        %s1346 = smul.u32 2, %s19
      $region56: #{point_mixture_density_head_forward.1} parent=51 // pred_fallthru
        _
    $region52: #{point_mixture_density_head_forward.1} parent=5 // pred_fallthru
      _
    %p1347 = scmp.le.s32.totalorder 2, %s14
    // Predicated region
    $region57: #{point_mixture_density_head_forward.1} parent=5 // pred_check
      %p1348 = pneg %p1347
    $region58: #{point_mixture_density_head_forward.1} parent=5 // pred_check_branch
      %1350 = sbr.rel (%p1348) target = $region60
    $region59: #{point_mixture_density_head_forward.1} parent=5 // pred_region
      %s1351 = ssub.s32 %s14, 2
      // Predicated region
      $region61: #{point_mixture_density_head_forward.1} parent=59 // pred_check
        %p1352 = pneg %p221
      $region62: #{point_mixture_density_head_forward.1} parent=59 // pred_check_branch
        %1354 = sbr.rel (%p1352) target = $region64
      $region63: #{point_mixture_density_head_forward.1} parent=59 // pred_region
        %s1355 = smul.u32 2, %s20
        %p1356 = scmp.lt.s32.totalorder %s1355, 3
        %s1357 = scalar_select %p1356, %s1355, 3
        %s1358 = smul.addr %s1357, 2
        %s1359 = smul.addr %s1358, 8
        %s1360 = scalar_lea.vmem %s8, %s1359
      $region64: #{point_mixture_density_head_forward.1} parent=59 // pred_fallthru
        _
    $region60: #{point_mixture_density_head_forward.1} parent=5 // pred_fallthru
      _
  $region6: #{point_mixture_density_head_forward.1} parent=0 // loop_footer
    %s18 = sadd.s32 1, %s14
  $region7: #{point_mixture_density_head_forward.1} parent=0 // loop_footer_branch
    %13 = sbr.rel target = $region3
  $region8: #{point_mixture_density_head_forward.1} parent=0 // loop_exit
    _

</llo_original>
